<compile_context>
chip_gen: v7x
topology: tpu7x:2x2x1
jax: 0.10.0
libtpu: 0.0.40
codegen_flags: <defaults>
</compile_context>

<pallas_src>
import math
import functools

import jax
import jax.numpy as jnp
from jax import lax
from jax.experimental import pallas as pl
from jax.experimental.pallas import tpu as pltpu


# ------------------------------------------------------------------
# Fused forward kernel (one invocation, everything batch-folded)
# ------------------------------------------------------------------
def _fused_vc_kernel(xcol_ref, w1_ref, b1_ref, mask_ref,        # conv1 + edge mask
                     w2_ref, b2_ref, w3_ref, b3_ref,            # conv2 (k=3), conv3 (k=1,p=1)
                     ssum_ref, sbc_ref,                          # per-segment sum / broadcast matrices
                     embn_ref, embT_ref,                         # normalized / raw-transposed codebook
                     sexp2_ref, pboth_ref, spadb_ref,            # decoder layout / shuffle matrices
                     wd_ref, bd_ref, ubig_ref,                   # decoder conv + upsample matrix
                     dec_ref, q_ref, sp_ref, diff_ref,           # outputs
                     *, n_embed, inv_L3, inv_BDL):
    f32, bf16 = jnp.float32, jnp.bfloat16

    def shift_mats(n):
        # Rp: column p reads column p-1 ; Rm: column p reads column p+1
        # (zero-filled at the global edges -- only garbage columns are affected).
        r = lax.broadcasted_iota(jnp.int32, (n, n), 0)
        c = lax.broadcasted_iota(jnp.int32, (n, n), 1)
        return (c == r + 1).astype(f32), (c == r - 1).astype(f32)

    mask = mask_ref[...]                                         # (1, B*L3), zero at segment edges

    # ---- encoder conv1 (k=4, s=2, p=1) + ReLU: one batch-folded im2col contraction ----
    h1 = jnp.dot(w1_ref[...], xcol_ref[...], preferred_element_type=f32)
    h1 = jnp.maximum(h1 + b1_ref[...], 0.0) * mask               # (channel, B*L3), layout [0|h1_b|0]

    # ---- conv2 (k=3, s=1, p=1) + ReLU: taps via lane-shift matmuls ----
    n1 = h1.shape[1]
    Rp1, Rm1 = shift_mats(n1)
    t1_prev = jnp.dot(h1, Rp1, preferred_element_type=f32).astype(bf16)
    t1_cur = h1.astype(bf16)
    t1_next = jnp.dot(h1, Rm1, preferred_element_type=f32).astype(bf16)
    w2 = w2_ref[...]                                             # (3, D, channel) bf16
    h2 = (jnp.dot(w2[0], t1_prev, preferred_element_type=f32)
          + jnp.dot(w2[1], t1_cur, preferred_element_type=f32)
          + jnp.dot(w2[2], t1_next, preferred_element_type=f32))
    h2 = jnp.maximum(h2 + b2_ref[...], 0.0) * mask               # (D, B*L3), layout [0|h2_b|0]

    # ---- conv3 (k=1, s=1, p=1): zeroed edge columns ARE the padding, so a plain
    #      1x1 matmul yields the full padded-length output (edge cols -> bias). ----
    h3 = jnp.dot(w3_ref[...], h2.astype(bf16), preferred_element_type=f32) + b3_ref[...]   # (D, B*L3)

    # ---- per-batch time normalization (L2 norm over time + eps, as in reference),
    #      then channel normalization (no eps in reference). ----
    S, ST = ssum_ref[...], sbc_ref[...]                          # (B*L3, B), (B, B*L3)
    mean_t = jnp.dot(h3, S, preferred_element_type=f32) * inv_L3          # (D, B)
    xc = h3 - jnp.dot(mean_t, ST, preferred_element_type=f32)
    inv_std = 1.0 / (jnp.sqrt(jnp.dot(xc * xc, S, preferred_element_type=f32)) + 1e-4)
    x1 = xc * jnp.dot(inv_std, ST, preferred_element_type=f32)
    cn = jnp.sqrt(jnp.sum(x1 * x1, axis=0, keepdims=True))                # (1, B*L3)
    x2 = x1 / cn                                                          # unit-norm columns

    # ---- vector quantization: unit-norm columns x unit-norm codebook rows
    #      => argmin(dist) == argmax(cross); tie-break = lowest index (torch.max). ----
    cross = jnp.dot(embn_ref[...], x2, preferred_element_type=f32)        # (n_embed, B*L3)
    cmax = jnp.max(cross, axis=0, keepdims=True)
    iota = lax.broadcasted_iota(jnp.int32, cross.shape, 0)
    ind = jnp.min(jnp.where(cross == cmax, iota, n_embed), axis=0, keepdims=True)
    one_hot = (iota == ind).astype(f32)
    quant = jnp.dot(embT_ref[...], one_hot, preferred_element_type=f32)   # RAW codebook rows, (D, B*L3)
    q_ref[...] = quant      # forward value of (quantize + quantize_1)/2 is exactly quantize

    d = quant - x2
    diff_ref[...] = jnp.sum(jnp.sum(d * d, axis=1, keepdims=True),
                            axis=0, keepdims=True) * inv_BDL

    # ---- speaker embedding ----
    sp = jnp.dot(h3 - quant, S, preferred_element_type=f32) * inv_L3      # (D, B)
    sp = sp / (jnp.sqrt(jnp.sum(sp * sp, axis=0, keepdims=True)) + 1e-4) / 3.0
    sp_ref[...] = sp

    # ---- decoders (dec_1 / dec_2 fused into one lane-folded slab) ----
    # quant expanded into BOTH halves of the padded decoder layout (one matmul),
    # speaker embedding for dec_1 and the idx-shuffled one for dec_2 selected by
    # a one-hot permutation matmul, then broadcast into the same layout.
    qpad = jnp.dot(quant, sexp2_ref[...], preferred_element_type=f32)     # (D, 2*B*Wd)
    sp_both = jnp.dot(sp, pboth_ref[...], preferred_element_type=f32)     # (D, 2*B) = [sp | sp[:, idx]]
    xin = qpad + jnp.dot(sp_both, spadb_ref[...], preferred_element_type=f32)   # layout [0|xin|0]

    n2 = xin.shape[1]
    Rp2, Rm2 = shift_mats(n2)
    t2_prev = jnp.dot(xin, Rp2, preferred_element_type=f32).astype(bf16)
    t2_cur = xin.astype(bf16)
    t2_next = jnp.dot(xin, Rm2, preferred_element_type=f32).astype(bf16)
    wd = wd_ref[...]                                             # (3, channel, D) bf16
    acc = (jnp.dot(wd[0], t2_prev, preferred_element_type=f32)
           + jnp.dot(wd[1], t2_cur, preferred_element_type=f32)
           + jnp.dot(wd[2], t2_next, preferred_element_type=f32)) + bd_ref[...]  # (channel, 2*B*Wd)

    # nearest-neighbour upsample + discard of the pad columns in one selection matmul
    dec_ref[...] = jnp.dot(acc, ubig_ref[...], preferred_element_type=f32)       # (channel, 2*B*out)


# ------------------------------------------------------------------
# Full VC_MODEL forward (single pallas_call)
# ------------------------------------------------------------------
def vc_model_forward(params, x, perm_key):
    f32, bf16 = jnp.float32, jnp.bfloat16
    B, Cin, T = x.shape
    channel = params["w1"].shape[0]
    D = channel * 2
    K1 = params["w1"].shape[2]
    n_embed = params["emb"].shape[0]
    stride1, p1 = 2, 1
    L1 = (T + 2 * p1 - K1) // stride1 + 1
    L3 = L1 + 2                    # conv2 keeps length; conv3 (k=1, p=1) adds 2  => segment width
    Wd = L3 + 2                    # decoder conv (k=3, p=1) padded segment width
    out_size = Cin                 # nn.Upsample(size=in_channel)

    # ---- conv1 im2col, batch folded into lanes, zero edge columns per batch so the
    #      whole encoder runs on a [0 | data | 0] segment layout of width L3. ----
    # TODO(synk): at production T, move the im2col in-kernel (strided pl.ds taps) to
    # avoid writing a K1x expanded copy of x to HBM, and L-tile the grid.
    xp = jnp.pad(x, ((0, 0), (0, 0), (p1, p1)))
    taps = jnp.stack(
        [xp[:, :, k:k + stride1 * (L1 - 1) + 1:stride1] for k in range(K1)], axis=2
    )                                                            # (B, Cin, K1, L1)
    xcol = jnp.transpose(taps, (1, 2, 0, 3))                     # (Cin, K1, B, L1)
    xcol = jnp.pad(xcol, ((0, 0), (0, 0), (0, 0), (1, 1)))       # zero edges -> (Cin, K1, B, L3)
    xcol = xcol.reshape(Cin * K1, B * L3).astype(bf16)

    # ---- weights (bf16 MXU operands, f32 biases) ----
    w1f = params["w1"].reshape(channel, Cin * K1).astype(bf16)
    w2k = jnp.transpose(params["w2"], (2, 0, 1)).astype(bf16)    # (3, D, channel)
    w3m = params["w3"][:, :, 0].astype(bf16)                     # (D, D)
    wdk = jnp.transpose(params["wd"], (2, 0, 1)).astype(bf16)    # (3, channel, D)
    b1c = params["b1"].reshape(channel, 1).astype(f32)
    b2c = params["b2"].reshape(D, 1).astype(f32)
    b3c = params["b3"].reshape(D, 1).astype(f32)
    bdc = params["bd"].reshape(channel, 1).astype(f32)

    emb = params["emb"].astype(f32)
    emb_n = emb / jnp.sqrt(jnp.sum(emb * emb, axis=1, keepdims=True))    # hoisted codebook norm (for dist)
    embT = emb.T                                                         # raw codebook (for the gather)

    # ---- structural 0/1 matrices, built once in the wrapper, consumed on the MXU ----
    off = jnp.arange(B * L3) % L3
    emask = ((off != 0) & (off != L3 - 1)).astype(f32)[None, :]          # zero per-segment edge columns
    S = jnp.kron(jnp.eye(B, dtype=f32), jnp.ones((L3, 1), f32))          # (B*L3, B)  per-segment sum
    ST = S.T                                                             # (B, B*L3)  per-segment broadcast
    E = jnp.eye(L3, Wd, k=1, dtype=f32)                                  # dense (L3) -> padded (Wd)
    sexp_half = jnp.kron(jnp.eye(B, dtype=f32), E)                       # (B*L3, B*Wd)
    sexp2 = jnp.concatenate([sexp_half, sexp_half], axis=1)              # quant into dec_1 AND dec_2 halves
    pad_row = jnp.pad(jnp.ones((1, L3), f32), ((0, 0), (1, 1)))          # (1, Wd) = [0,1,...,1,0]
    spadb = jnp.kron(jnp.eye(2 * B, dtype=f32), pad_row)                 # (2B, 2B*Wd) speaker-embed broadcast
    src = (jnp.arange(out_size) * L3) // out_size                        # nearest-neighbour source indices
    useg = (jnp.arange(Wd)[:, None] == (src + 1)[None, :]).astype(f32)   # (Wd, out): upsample + pad discard
    ubig = jnp.kron(jnp.eye(2 * B, dtype=f32), useg)                     # (2B*Wd, 2B*out)

    # TODO(synk): torch.randperm uses torch's host RNG stream; replaced with jax.random.permutation.
    idx = jax.random.permutation(perm_key, B).astype(jnp.int32)
    P = (idx[None, :] == jnp.arange(B)[:, None]).astype(f32)             # P[j, b] = 1 iff j == idx[b]
    pboth = jnp.concatenate([jnp.eye(B, dtype=f32), P], axis=1)          # (B, 2B): [identity | shuffle]

    kernel = functools.partial(_fused_vc_kernel, n_embed=n_embed,
                               inv_L3=1.0 / L3, inv_BDL=1.0 / (B * D * L3))

    inputs = (xcol, w1f, b1c, emask, w2k, b2c, w3m, b3c,
              S, ST, emb_n, embT, sexp2, pboth, spadb, wdk, bdc, ubig)

    def full_spec(a):
        nd = a.ndim
        return pl.BlockSpec(a.shape, lambda i, _nd=nd: (0,) * _nd)

    grid_spec = pltpu.PrefetchScalarGridSpec(
        num_scalar_prefetch=0,
        grid=(1,),   # single fused step; TODO(synk): L-tile + "parallel" axis at production sizes
        in_specs=[full_spec(a) for a in inputs],
        out_specs=(
            pl.BlockSpec((channel, 2 * B * out_size), lambda i: (0, 0)),
            pl.BlockSpec((D, B * L3), lambda i: (0, 0)),
            pl.BlockSpec((D, B), lambda i: (0, 0)),
            pl.BlockSpec((1, 1), lambda i: (0, 0)),
        ),
    )

    dec_all, q_flat, sp_mat, diff2d = pl.pallas_call(
        kernel,
        out_shape=(
            jax.ShapeDtypeStruct((channel, 2 * B * out_size), f32),
            jax.ShapeDtypeStruct((D, B * L3), f32),
            jax.ShapeDtypeStruct((D, B), f32),
            jax.ShapeDtypeStruct((1, 1), f32),
        ),
        grid_spec=grid_spec,
        compiler_params=pltpu.CompilerParams(dimension_semantics=("arbitrary",)),
    )(*inputs)

    # layout plumbing back to the PyTorch output shapes
    dec = dec_all.reshape(channel, 2, B, out_size).transpose(1, 2, 0, 3)
    dec_1, dec_2 = dec[0], dec[1]
    q_after = q_flat.reshape(D, B, L3).transpose(1, 0, 2)                # (B, D, L3)
    sp_embed = sp_mat.T[:, :, None]                                      # (B, D, 1)
    diff = diff2d[0, 0]
    return dec_1, dec_2, (q_after,), (sp_embed,), diff, idx


# ------------------------------------------------------------------
# Deterministic parameter init (PyTorch-style shapes)
# ------------------------------------------------------------------
def init_params(key, in_channel, channel, n_embed):
    D = channel * 2
    ks = jax.random.split(key, 9)

    def u(k, shape, fan_in):
        bound = 1.0 / math.sqrt(fan_in)
        return jax.random.uniform(k, shape, jnp.float32, -bound, bound)

    return dict(
        w1=u(ks[0], (channel, in_channel, 4), in_channel * 4),
        b1=u(ks[1], (channel,), in_channel * 4),
        w2=u(ks[2], (D, channel, 3), channel * 3),
        b2=u(ks[3], (D,), channel * 3),
        w3=u(ks[4], (D, D, 1), D),
        b3=u(ks[5], (D,), D),
        emb=jax.random.normal(ks[6], (n_embed, D), jnp.float32),
        wd=u(ks[7], (channel, D, 3), D * 3),
        bd=u(ks[8], (channel,), D * 3),
    )


if __name__ == "__main__":
    # Small shapes consistent with the module: in_channel=16, channel=8, n_embed=16
    in_channel, channel, n_embed = 16, 8, 16
    B, T = 2, 16

    key = jax.random.PRNGKey(0)
    pkey, xkey, permkey = jax.random.split(key, 3)
    params = init_params(pkey, in_channel, channel, n_embed)
    x = jax.random.normal(xkey, (B, in_channel, T), jnp.float32)   # (B, in_channel, T), NCW

    outs = jax.jit(vc_model_forward)(params, x, permkey)
    outs = jax.block_until_ready(outs)

    dec_1, dec_2, enc_b, sp_embed, diff, idx = outs
    assert dec_1.shape == (B, channel, in_channel)
    assert dec_2.shape == (B, channel, in_channel)
    assert enc_b[0].shape == (B, 2 * channel, T // 2 + 2)
    assert sp_embed[0].shape == (B, 2 * channel, 1)
    assert bool(jnp.isfinite(diff))
    print("KERNEL_OK")
</pallas_src>

<mosaic_0001>
module attributes {stable_mosaic.version = 11 : i64} {
  func.func @_fused_vc_kernel(%arg0: i32, %arg1: memref<64x20xbf16, #tpu.memory_space<vmem>>, %arg2: memref<8x64xbf16, #tpu.memory_space<vmem>>, %arg3: memref<8x1xf32, #tpu.memory_space<vmem>>, %arg4: memref<1x20xf32, #tpu.memory_space<vmem>>, %arg5: memref<3x16x8xbf16, #tpu.memory_space<vmem>>, %arg6: memref<16x1xf32, #tpu.memory_space<vmem>>, %arg7: memref<16x16xbf16, #tpu.memory_space<vmem>>, %arg8: memref<16x1xf32, #tpu.memory_space<vmem>>, %arg9: memref<20x2xf32, #tpu.memory_space<vmem>>, %arg10: memref<2x20xf32, #tpu.memory_space<vmem>>, %arg11: memref<16x16xf32, #tpu.memory_space<vmem>>, %arg12: memref<16x16xf32, #tpu.memory_space<vmem>>, %arg13: memref<20x48xf32, #tpu.memory_space<vmem>>, %arg14: memref<2x4xf32, #tpu.memory_space<vmem>>, %arg15: memref<4x48xf32, #tpu.memory_space<vmem>>, %arg16: memref<3x8x16xbf16, #tpu.memory_space<vmem>>, %arg17: memref<8x1xf32, #tpu.memory_space<vmem>>, %arg18: memref<48x64xf32, #tpu.memory_space<vmem>>, %arg19: memref<8x64xf32, #tpu.memory_space<vmem>>, %arg20: memref<16x20xf32, #tpu.memory_space<vmem>>, %arg21: memref<16x2xf32, #tpu.memory_space<vmem>>, %arg22: memref<1x1xf32, #tpu.memory_space<vmem>>) attributes {dimension_semantics = [#tpu.dimension_semantics<arbitrary>], iteration_bounds = array<i64: 1>, scalar_prefetch = 0 : i64, scratch_operands = 0 : i64, tpu.core_type = #tpu.core_type<tc>, window_params = [{pipeline_mode = #tpu.pipeline_mode<synchronous>, transform_indices = @transform_0, window_bounds = array<i64: 64, 20>}, {pipeline_mode = #tpu.pipeline_mode<synchronous>, transform_indices = @transform_1, window_bounds = array<i64: 8, 64>}, {pipeline_mode = #tpu.pipeline_mode<synchronous>, transform_indices = @transform_2, window_bounds = array<i64: 8, 1>}, {pipeline_mode = #tpu.pipeline_mode<synchronous>, transform_indices = @transform_3, window_bounds = array<i64: 1, 20>}, {pipeline_mode = #tpu.pipeline_mode<synchronous>, transform_indices = @transform_4, window_bounds = array<i64: 3, 16, 8>}, {pipeline_mode = #tpu.pipeline_mode<synchronous>, transform_indices = @transform_5, window_bounds = array<i64: 16, 1>}, {pipeline_mode = #tpu.pipeline_mode<synchronous>, transform_indices = @transform_6, window_bounds = array<i64: 16, 16>}, {pipeline_mode = #tpu.pipeline_mode<synchronous>, transform_indices = @transform_7, window_bounds = array<i64: 16, 1>}, {pipeline_mode = #tpu.pipeline_mode<synchronous>, transform_indices = @transform_8, window_bounds = array<i64: 20, 2>}, {pipeline_mode = #tpu.pipeline_mode<synchronous>, transform_indices = @transform_9, window_bounds = array<i64: 2, 20>}, {pipeline_mode = #tpu.pipeline_mode<synchronous>, transform_indices = @transform_10, window_bounds = array<i64: 16, 16>}, {pipeline_mode = #tpu.pipeline_mode<synchronous>, transform_indices = @transform_11, window_bounds = array<i64: 16, 16>}, {pipeline_mode = #tpu.pipeline_mode<synchronous>, transform_indices = @transform_12, window_bounds = array<i64: 20, 48>}, {pipeline_mode = #tpu.pipeline_mode<synchronous>, transform_indices = @transform_13, window_bounds = array<i64: 2, 4>}, {pipeline_mode = #tpu.pipeline_mode<synchronous>, transform_indices = @transform_14, window_bounds = array<i64: 4, 48>}, {pipeline_mode = #tpu.pipeline_mode<synchronous>, transform_indices = @transform_15, window_bounds = array<i64: 3, 8, 16>}, {pipeline_mode = #tpu.pipeline_mode<synchronous>, transform_indices = @transform_16, window_bounds = array<i64: 8, 1>}, {pipeline_mode = #tpu.pipeline_mode<synchronous>, transform_indices = @transform_17, window_bounds = array<i64: 48, 64>}, {pipeline_mode = #tpu.pipeline_mode<synchronous>, transform_indices = @transform_18, window_bounds = array<i64: 8, 64>}, {pipeline_mode = #tpu.pipeline_mode<synchronous>, transform_indices = @transform_19, window_bounds = array<i64: 16, 20>}, {pipeline_mode = #tpu.pipeline_mode<synchronous>, transform_indices = @transform_20, window_bounds = array<i64: 16, 2>}, {pipeline_mode = #tpu.pipeline_mode<synchronous>, transform_indices = @transform_21, window_bounds = array<i64: 1, 1>}]} {
    %c0 = arith.constant 0 : index
    %c0_0 = arith.constant 0 : index
    %0 = vector.load %arg4[%c0, %c0_0] : memref<1x20xf32, #tpu.memory_space<vmem>>, vector<1x20xf32>
    %c0_1 = arith.constant 0 : index
    %c0_2 = arith.constant 0 : index
    %1 = vector.load %arg2[%c0_1, %c0_2] : memref<8x64xbf16, #tpu.memory_space<vmem>>, vector<8x64xbf16>
    %c0_3 = arith.constant 0 : index
    %c0_4 = arith.constant 0 : index
    %2 = vector.load %arg1[%c0_3, %c0_4] : memref<64x20xbf16, #tpu.memory_space<vmem>>, vector<64x20xbf16>
    %cst = arith.constant dense<0.000000e+00> : vector<8x20xf32>
    %3 = tpu.matmul %1, %2, %cst {dimension_numbers = #tpu.dot_dimension_numbers<[1], [0], [0], [1], [0, 0, 1, 1], [], []>} : vector<8x64xbf16>, vector<64x20xbf16>, vector<8x20xf32> -> vector<8x20xf32>
    %c0_5 = arith.constant 0 : index
    %c0_6 = arith.constant 0 : index
    %4 = vector.load %arg3[%c0_5, %c0_6] : memref<8x1xf32, #tpu.memory_space<vmem>>, vector<8x1xf32>
    %5 = vector.broadcast %4 : vector<8x1xf32> to vector<8x20xf32>
    %6 = arith.addf %3, %5 : vector<8x20xf32>
    %cst_7 = arith.constant 0.000000e+00 : f32
    %7 = vector.broadcast %cst_7 : f32 to vector<8x20xf32>
    %8 = arith.maximumf %6, %7 : vector<8x20xf32>
    %9 = vector.broadcast %0 : vector<1x20xf32> to vector<8x20xf32>
    %10 = arith.mulf %8, %9 : vector<8x20xf32>
    %11 = tpu.iota {dimensions = array<i32: 0>} : vector<20x20xi32>
    %12 = tpu.iota {dimensions = array<i32: 1>} : vector<20x20xi32>
    %c1_i32 = arith.constant 1 : i32
    %13 = vector.broadcast %c1_i32 : i32 to vector<20x20xi32>
    %14 = arith.addi %11, %13 : vector<20x20xi32>
    %15 = arith.cmpi eq, %12, %14 : vector<20x20xi32>
    %16 = arith.extui %15 : vector<20x20xi1> to vector<20x20xi32>
    %17 = arith.sitofp %16 : vector<20x20xi32> to vector<20x20xf32>
    %c1_i32_8 = arith.constant 1 : i32
    %18 = vector.broadcast %c1_i32_8 : i32 to vector<20x20xi32>
    %19 = arith.subi %11, %18 : vector<20x20xi32>
    %20 = arith.cmpi eq, %12, %19 : vector<20x20xi32>
    %21 = arith.extui %20 : vector<20x20xi1> to vector<20x20xi32>
    %22 = arith.sitofp %21 : vector<20x20xi32> to vector<20x20xf32>
    %cst_9 = arith.constant dense<0.000000e+00> : vector<8x20xf32>
    %23 = tpu.matmul %10, %17, %cst_9 {dimension_numbers = #tpu.dot_dimension_numbers<[1], [0], [0], [1], [0, 0, 1, 1], [], []>} : vector<8x20xf32>, vector<20x20xf32>, vector<8x20xf32> -> vector<8x20xf32>
    %24 = arith.truncf %23 : vector<8x20xf32> to vector<8x20xbf16>
    %25 = arith.truncf %10 : vector<8x20xf32> to vector<8x20xbf16>
    %cst_10 = arith.constant dense<0.000000e+00> : vector<8x20xf32>
    %26 = tpu.matmul %10, %22, %cst_10 {dimension_numbers = #tpu.dot_dimension_numbers<[1], [0], [0], [1], [0, 0, 1, 1], [], []>} : vector<8x20xf32>, vector<20x20xf32>, vector<8x20xf32> -> vector<8x20xf32>
    %27 = arith.truncf %26 : vector<8x20xf32> to vector<8x20xbf16>
    %c0_11 = arith.constant 0 : index
    %c0_12 = arith.constant 0 : index
    %c0_13 = arith.constant 0 : index
    %28 = vector.load %arg5[%c0_11, %c0_12, %c0_13] : memref<3x16x8xbf16, #tpu.memory_space<vmem>>, vector<3x16x8xbf16>
    %29 = vector.extract_strided_slice %28 {offsets = [0, 0, 0], sizes = [1, 16, 8], strides = [1, 1, 1]} : vector<3x16x8xbf16> to vector<1x16x8xbf16>
    %30 = vector.shape_cast %29 : vector<1x16x8xbf16> to vector<16x8xbf16>
    %cst_14 = arith.constant dense<0.000000e+00> : vector<16x20xf32>
    %31 = tpu.matmul %30, %24, %cst_14 {dimension_numbers = #tpu.dot_dimension_numbers<[1], [0], [0], [1], [0, 0, 1, 1], [], []>} : vector<16x8xbf16>, vector<8x20xbf16>, vector<16x20xf32> -> vector<16x20xf32>
    %32 = vector.extract_strided_slice %28 {offsets = [1, 0, 0], sizes = [1, 16, 8], strides = [1, 1, 1]} : vector<3x16x8xbf16> to vector<1x16x8xbf16>
    %33 = vector.shape_cast %32 : vector<1x16x8xbf16> to vector<16x8xbf16>
    %cst_15 = arith.constant dense<0.000000e+00> : vector<16x20xf32>
    %34 = tpu.matmul %33, %25, %cst_15 {dimension_numbers = #tpu.dot_dimension_numbers<[1], [0], [0], [1], [0, 0, 1, 1], [], []>} : vector<16x8xbf16>, vector<8x20xbf16>, vector<16x20xf32> -> vector<16x20xf32>
    %35 = arith.addf %31, %34 : vector<16x20xf32>
    %36 = vector.extract_strided_slice %28 {offsets = [2, 0, 0], sizes = [1, 16, 8], strides = [1, 1, 1]} : vector<3x16x8xbf16> to vector<1x16x8xbf16>
    %37 = vector.shape_cast %36 : vector<1x16x8xbf16> to vector<16x8xbf16>
    %cst_16 = arith.constant dense<0.000000e+00> : vector<16x20xf32>
    %38 = tpu.matmul %37, %27, %cst_16 {dimension_numbers = #tpu.dot_dimension_numbers<[1], [0], [0], [1], [0, 0, 1, 1], [], []>} : vector<16x8xbf16>, vector<8x20xbf16>, vector<16x20xf32> -> vector<16x20xf32>
    %39 = arith.addf %35, %38 : vector<16x20xf32>
    %c0_17 = arith.constant 0 : index
    %c0_18 = arith.constant 0 : index
    %40 = vector.load %arg6[%c0_17, %c0_18] : memref<16x1xf32, #tpu.memory_space<vmem>>, vector<16x1xf32>
    %41 = vector.broadcast %40 : vector<16x1xf32> to vector<16x20xf32>
    %42 = arith.addf %39, %41 : vector<16x20xf32>
    %cst_19 = arith.constant 0.000000e+00 : f32
    %43 = vector.broadcast %cst_19 : f32 to vector<16x20xf32>
    %44 = arith.maximumf %42, %43 : vector<16x20xf32>
    %45 = vector.broadcast %0 : vector<1x20xf32> to vector<16x20xf32>
    %46 = arith.mulf %44, %45 : vector<16x20xf32>
    %c0_20 = arith.constant 0 : index
    %c0_21 = arith.constant 0 : index
    %47 = vector.load %arg7[%c0_20, %c0_21] : memref<16x16xbf16, #tpu.memory_space<vmem>>, vector<16x16xbf16>
    %48 = arith.truncf %46 : vector<16x20xf32> to vector<16x20xbf16>
    %cst_22 = arith.constant dense<0.000000e+00> : vector<16x20xf32>
    %49 = tpu.matmul %47, %48, %cst_22 {dimension_numbers = #tpu.dot_dimension_numbers<[1], [0], [0], [1], [0, 0, 1, 1], [], []>} : vector<16x16xbf16>, vector<16x20xbf16>, vector<16x20xf32> -> vector<16x20xf32>
    %c0_23 = arith.constant 0 : index
    %c0_24 = arith.constant 0 : index
    %50 = vector.load %arg8[%c0_23, %c0_24] : memref<16x1xf32, #tpu.memory_space<vmem>>, vector<16x1xf32>
    %51 = vector.broadcast %50 : vector<16x1xf32> to vector<16x20xf32>
    %52 = arith.addf %49, %51 : vector<16x20xf32>
    %c0_25 = arith.constant 0 : index
    %c0_26 = arith.constant 0 : index
    %53 = vector.load %arg9[%c0_25, %c0_26] : memref<20x2xf32, #tpu.memory_space<vmem>>, vector<20x2xf32>
    %c0_27 = arith.constant 0 : index
    %c0_28 = arith.constant 0 : index
    %54 = vector.load %arg10[%c0_27, %c0_28] : memref<2x20xf32, #tpu.memory_space<vmem>>, vector<2x20xf32>
    %cst_29 = arith.constant dense<0.000000e+00> : vector<16x2xf32>
    %55 = tpu.matmul %52, %53, %cst_29 {dimension_numbers = #tpu.dot_dimension_numbers<[1], [0], [0], [1], [0, 0, 1, 1], [], []>} : vector<16x20xf32>, vector<20x2xf32>, vector<16x2xf32> -> vector<16x2xf32>
    %cst_30 = arith.constant 1.000000e-01 : f32
    %56 = vector.broadcast %cst_30 : f32 to vector<16x2xf32>
    %57 = arith.mulf %55, %56 : vector<16x2xf32>
    %cst_31 = arith.constant dense<0.000000e+00> : vector<16x20xf32>
    %58 = tpu.matmul %57, %54, %cst_31 {dimension_numbers = #tpu.dot_dimension_numbers<[1], [0], [0], [1], [0, 0, 1, 1], [], []>} : vector<16x2xf32>, vector<2x20xf32>, vector<16x20xf32> -> vector<16x20xf32>
    %59 = arith.subf %52, %58 : vector<16x20xf32>
    %60 = arith.mulf %59, %59 : vector<16x20xf32>
    %cst_32 = arith.constant dense<0.000000e+00> : vector<16x2xf32>
    %61 = tpu.matmul %60, %53, %cst_32 {dimension_numbers = #tpu.dot_dimension_numbers<[1], [0], [0], [1], [0, 0, 1, 1], [], []>} : vector<16x20xf32>, vector<20x2xf32>, vector<16x2xf32> -> vector<16x2xf32>
    %62 = math.sqrt %61 : vector<16x2xf32>
    %cst_33 = arith.constant 9.99999974E-5 : f32
    %63 = vector.broadcast %cst_33 : f32 to vector<16x2xf32>
    %64 = arith.addf %62, %63 : vector<16x2xf32>
    %cst_34 = arith.constant 1.000000e+00 : f32
    %65 = vector.broadcast %cst_34 : f32 to vector<16x2xf32>
    %66 = arith.divf %65, %64 : vector<16x2xf32>
    %cst_35 = arith.constant dense<0.000000e+00> : vector<16x20xf32>
    %67 = tpu.matmul %66, %54, %cst_35 {dimension_numbers = #tpu.dot_dimension_numbers<[1], [0], [0], [1], [0, 0, 1, 1], [], []>} : vector<16x2xf32>, vector<2x20xf32>, vector<16x20xf32> -> vector<16x20xf32>
    %68 = arith.mulf %59, %67 : vector<16x20xf32>
    %69 = arith.mulf %68, %68 : vector<16x20xf32>
    %cst_36 = arith.constant dense<0.000000e+00> : vector<20xf32>
    %70 = vector.multi_reduction <add>, %69, %cst_36 [0] : vector<16x20xf32> to vector<20xf32>
    %71 = vector.shape_cast %70 : vector<20xf32> to vector<1x20xf32>
    %72 = math.sqrt %71 : vector<1x20xf32>
    %73 = vector.broadcast %72 : vector<1x20xf32> to vector<16x20xf32>
    %74 = arith.divf %68, %73 : vector<16x20xf32>
    %c0_37 = arith.constant 0 : index
    %c0_38 = arith.constant 0 : index
    %75 = vector.load %arg11[%c0_37, %c0_38] : memref<16x16xf32, #tpu.memory_space<vmem>>, vector<16x16xf32>
    %cst_39 = arith.constant dense<0.000000e+00> : vector<16x20xf32>
    %76 = tpu.matmul %75, %74, %cst_39 {dimension_numbers = #tpu.dot_dimension_numbers<[1], [0], [0], [1], [0, 0, 1, 1], [], []>} : vector<16x16xf32>, vector<16x20xf32>, vector<16x20xf32> -> vector<16x20xf32>
    %cst_40 = arith.constant dense<0xFF800000> : vector<20xf32>
    %77 = vector.multi_reduction <maximumf>, %76, %cst_40 [0] : vector<16x20xf32> to vector<20xf32>
    %78 = vector.shape_cast %77 : vector<20xf32> to vector<1x20xf32>
    %79 = tpu.iota {dimensions = array<i32: 0>} : vector<16x20xi32>
    %80 = vector.broadcast %78 : vector<1x20xf32> to vector<16x20xf32>
    %81 = arith.cmpf oeq, %76, %80 : vector<16x20xf32>
    %c16_i32 = arith.constant 16 : i32
    %82 = vector.broadcast %c16_i32 : i32 to vector<16x20xi32>
    %83 = arith.select %81, %79, %82 : vector<16x20xi1>, vector<16x20xi32>
    %cst_41 = arith.constant dense<2147483647> : vector<20xi32>
    %84 = vector.multi_reduction <minsi>, %83, %cst_41 [0] : vector<16x20xi32> to vector<20xi32>
    %85 = vector.shape_cast %84 : vector<20xi32> to vector<1x20xi32>
    %86 = vector.broadcast %85 : vector<1x20xi32> to vector<16x20xi32>
    %87 = arith.cmpi eq, %79, %86 : vector<16x20xi32>
    %88 = arith.extui %87 : vector<16x20xi1> to vector<16x20xi32>
    %89 = arith.sitofp %88 : vector<16x20xi32> to vector<16x20xf32>
    %c0_42 = arith.constant 0 : index
    %c0_43 = arith.constant 0 : index
    %90 = vector.load %arg12[%c0_42, %c0_43] : memref<16x16xf32, #tpu.memory_space<vmem>>, vector<16x16xf32>
    %cst_44 = arith.constant dense<0.000000e+00> : vector<16x20xf32>
    %91 = tpu.matmul %90, %89, %cst_44 {dimension_numbers = #tpu.dot_dimension_numbers<[1], [0], [0], [1], [0, 0, 1, 1], [], []>} : vector<16x16xf32>, vector<16x20xf32>, vector<16x20xf32> -> vector<16x20xf32>
    %c0_45 = arith.constant 0 : index
    %c0_46 = arith.constant 0 : index
    %92 = vector.load %arg20[%c0_45, %c0_46] : memref<16x20xf32, #tpu.memory_space<vmem>>, vector<16x20xf32>
    tpu.vector_store %arg20[%c0_45, %c0_46], %91 {strides = array<i32>} : memref<16x20xf32, #tpu.memory_space<vmem>>, vector<16x20xf32>,
    %93 = arith.subf %91, %74 : vector<16x20xf32>
    %94 = arith.mulf %93, %93 : vector<16x20xf32>
    %cst_47 = arith.constant dense<0.000000e+00> : vector<16xf32>
    %95 = vector.multi_reduction <add>, %94, %cst_47 [1] : vector<16x20xf32> to vector<16xf32>
    %96 = vector.shape_cast %95 : vector<16xf32> to vector<16x1xf32>
    %cst_48 = arith.constant dense<0.000000e+00> : vector<1xf32>
    %97 = vector.multi_reduction <add>, %96, %cst_48 [0] : vector<16x1xf32> to vector<1xf32>
    %98 = vector.shape_cast %97 : vector<1xf32> to vector<1x1xf32>
    %cst_49 = arith.constant 3.125000e-03 : f32
    %99 = vector.broadcast %cst_49 : f32 to vector<1x1xf32>
    %100 = arith.mulf %98, %99 : vector<1x1xf32>
    %c0_50 = arith.constant 0 : index
    %c0_51 = arith.constant 0 : index
    %101 = vector.load %arg22[%c0_50, %c0_51] : memref<1x1xf32, #tpu.memory_space<vmem>>, vector<1x1xf32>
    tpu.vector_store %arg22[%c0_50, %c0_51], %100 {strides = array<i32>} : memref<1x1xf32, #tpu.memory_space<vmem>>, vector<1x1xf32>,
    %102 = arith.subf %52, %91 : vector<16x20xf32>
    %cst_52 = arith.constant dense<0.000000e+00> : vector<16x2xf32>
    %103 = tpu.matmul %102, %53, %cst_52 {dimension_numbers = #tpu.dot_dimension_numbers<[1], [0], [0], [1], [0, 0, 1, 1], [], []>} : vector<16x20xf32>, vector<20x2xf32>, vector<16x2xf32> -> vector<16x2xf32>
    %cst_53 = arith.constant 1.000000e-01 : f32
    %104 = vector.broadcast %cst_53 : f32 to vector<16x2xf32>
    %105 = arith.mulf %103, %104 : vector<16x2xf32>
    %106 = arith.mulf %105, %105 : vector<16x2xf32>
    %cst_54 = arith.constant dense<0.000000e+00> : vector<2xf32>
    %107 = vector.multi_reduction <add>, %106, %cst_54 [0] : vector<16x2xf32> to vector<2xf32>
    %108 = vector.shape_cast %107 : vector<2xf32> to vector<1x2xf32>
    %109 = math.sqrt %108 : vector<1x2xf32>
    %cst_55 = arith.constant 9.99999974E-5 : f32
    %110 = vector.broadcast %cst_55 : f32 to vector<1x2xf32>
    %111 = arith.addf %109, %110 : vector<1x2xf32>
    %112 = vector.broadcast %111 : vector<1x2xf32> to vector<16x2xf32>
    %113 = arith.divf %105, %112 : vector<16x2xf32>
    %cst_56 = arith.constant 3.000000e+00 : f32
    %114 = vector.broadcast %cst_56 : f32 to vector<16x2xf32>
    %115 = arith.divf %113, %114 : vector<16x2xf32>
    %c0_57 = arith.constant 0 : index
    %c0_58 = arith.constant 0 : index
    %116 = vector.load %arg21[%c0_57, %c0_58] : memref<16x2xf32, #tpu.memory_space<vmem>>, vector<16x2xf32>
    tpu.vector_store %arg21[%c0_57, %c0_58], %115 {strides = array<i32>} : memref<16x2xf32, #tpu.memory_space<vmem>>, vector<16x2xf32>,
    %c0_59 = arith.constant 0 : index
    %c0_60 = arith.constant 0 : index
    %117 = vector.load %arg13[%c0_59, %c0_60] : memref<20x48xf32, #tpu.memory_space<vmem>>, vector<20x48xf32>
    %cst_61 = arith.constant dense<0.000000e+00> : vector<16x48xf32>
    %118 = tpu.matmul %91, %117, %cst_61 {dimension_numbers = #tpu.dot_dimension_numbers<[1], [0], [0], [1], [0, 0, 1, 1], [], []>} : vector<16x20xf32>, vector<20x48xf32>, vector<16x48xf32> -> vector<16x48xf32>
    %c0_62 = arith.constant 0 : index
    %c0_63 = arith.constant 0 : index
    %119 = vector.load %arg14[%c0_62, %c0_63] : memref<2x4xf32, #tpu.memory_space<vmem>>, vector<2x4xf32>
    %cst_64 = arith.constant dense<0.000000e+00> : vector<16x4xf32>
    %120 = tpu.matmul %115, %119, %cst_64 {dimension_numbers = #tpu.dot_dimension_numbers<[1], [0], [0], [1], [0, 0, 1, 1], [], []>} : vector<16x2xf32>, vector<2x4xf32>, vector<16x4xf32> -> vector<16x4xf32>
    %c0_65 = arith.constant 0 : index
    %c0_66 = arith.constant 0 : index
    %121 = vector.load %arg15[%c0_65, %c0_66] : memref<4x48xf32, #tpu.memory_space<vmem>>, vector<4x48xf32>
    %cst_67 = arith.constant dense<0.000000e+00> : vector<16x48xf32>
    %122 = tpu.matmul %120, %121, %cst_67 {dimension_numbers = #tpu.dot_dimension_numbers<[1], [0], [0], [1], [0, 0, 1, 1], [], []>} : vector<16x4xf32>, vector<4x48xf32>, vector<16x48xf32> -> vector<16x48xf32>
    %123 = arith.addf %118, %122 : vector<16x48xf32>
    %124 = tpu.iota {dimensions = array<i32: 0>} : vector<48x48xi32>
    %125 = tpu.iota {dimensions = array<i32: 1>} : vector<48x48xi32>
    %c1_i32_68 = arith.constant 1 : i32
    %126 = vector.broadcast %c1_i32_68 : i32 to vector<48x48xi32>
    %127 = arith.addi %124, %126 : vector<48x48xi32>
    %128 = arith.cmpi eq, %125, %127 : vector<48x48xi32>
    %129 = arith.extui %128 : vector<48x48xi1> to vector<48x48xi32>
    %130 = arith.sitofp %129 : vector<48x48xi32> to vector<48x48xf32>
    %c1_i32_69 = arith.constant 1 : i32
    %131 = vector.broadcast %c1_i32_69 : i32 to vector<48x48xi32>
    %132 = arith.subi %124, %131 : vector<48x48xi32>
    %133 = arith.cmpi eq, %125, %132 : vector<48x48xi32>
    %134 = arith.extui %133 : vector<48x48xi1> to vector<48x48xi32>
    %135 = arith.sitofp %134 : vector<48x48xi32> to vector<48x48xf32>
    %cst_70 = arith.constant dense<0.000000e+00> : vector<16x48xf32>
    %136 = tpu.matmul %123, %130, %cst_70 {dimension_numbers = #tpu.dot_dimension_numbers<[1], [0], [0], [1], [0, 0, 1, 1], [], []>} : vector<16x48xf32>, vector<48x48xf32>, vector<16x48xf32> -> vector<16x48xf32>
    %137 = arith.truncf %136 : vector<16x48xf32> to vector<16x48xbf16>
    %138 = arith.truncf %123 : vector<16x48xf32> to vector<16x48xbf16>
    %cst_71 = arith.constant dense<0.000000e+00> : vector<16x48xf32>
    %139 = tpu.matmul %123, %135, %cst_71 {dimension_numbers = #tpu.dot_dimension_numbers<[1], [0], [0], [1], [0, 0, 1, 1], [], []>} : vector<16x48xf32>, vector<48x48xf32>, vector<16x48xf32> -> vector<16x48xf32>
    %140 = arith.truncf %139 : vector<16x48xf32> to vector<16x48xbf16>
    %c0_72 = arith.constant 0 : index
    %c0_73 = arith.constant 0 : index
    %c0_74 = arith.constant 0 : index
    %141 = vector.load %arg16[%c0_72, %c0_73, %c0_74] : memref<3x8x16xbf16, #tpu.memory_space<vmem>>, vector<3x8x16xbf16>
    %142 = vector.extract_strided_slice %141 {offsets = [0, 0, 0], sizes = [1, 8, 16], strides = [1, 1, 1]} : vector<3x8x16xbf16> to vector<1x8x16xbf16>
    %143 = vector.shape_cast %142 : vector<1x8x16xbf16> to vector<8x16xbf16>
    %cst_75 = arith.constant dense<0.000000e+00> : vector<8x48xf32>
    %144 = tpu.matmul %143, %137, %cst_75 {dimension_numbers = #tpu.dot_dimension_numbers<[1], [0], [0], [1], [0, 0, 1, 1], [], []>} : vector<8x16xbf16>, vector<16x48xbf16>, vector<8x48xf32> -> vector<8x48xf32>
    %145 = vector.extract_strided_slice %141 {offsets = [1, 0, 0], sizes = [1, 8, 16], strides = [1, 1, 1]} : vector<3x8x16xbf16> to vector<1x8x16xbf16>
    %146 = vector.shape_cast %145 : vector<1x8x16xbf16> to vector<8x16xbf16>
    %cst_76 = arith.constant dense<0.000000e+00> : vector<8x48xf32>
    %147 = tpu.matmul %146, %138, %cst_76 {dimension_numbers = #tpu.dot_dimension_numbers<[1], [0], [0], [1], [0, 0, 1, 1], [], []>} : vector<8x16xbf16>, vector<16x48xbf16>, vector<8x48xf32> -> vector<8x48xf32>
    %148 = arith.addf %144, %147 : vector<8x48xf32>
    %149 = vector.extract_strided_slice %141 {offsets = [2, 0, 0], sizes = [1, 8, 16], strides = [1, 1, 1]} : vector<3x8x16xbf16> to vector<1x8x16xbf16>
    %150 = vector.shape_cast %149 : vector<1x8x16xbf16> to vector<8x16xbf16>
    %cst_77 = arith.constant dense<0.000000e+00> : vector<8x48xf32>
    %151 = tpu.matmul %150, %140, %cst_77 {dimension_numbers = #tpu.dot_dimension_numbers<[1], [0], [0], [1], [0, 0, 1, 1], [], []>} : vector<8x16xbf16>, vector<16x48xbf16>, vector<8x48xf32> -> vector<8x48xf32>
    %152 = arith.addf %148, %151 : vector<8x48xf32>
    %c0_78 = arith.constant 0 : index
    %c0_79 = arith.constant 0 : index
    %153 = vector.load %arg17[%c0_78, %c0_79] : memref<8x1xf32, #tpu.memory_space<vmem>>, vector<8x1xf32>
    %154 = vector.broadcast %153 : vector<8x1xf32> to vector<8x48xf32>
    %155 = arith.addf %152, %154 : vector<8x48xf32>
    %c0_80 = arith.constant 0 : index
    %c0_81 = arith.constant 0 : index
    %156 = vector.load %arg18[%c0_80, %c0_81] : memref<48x64xf32, #tpu.memory_space<vmem>>, vector<48x64xf32>
    %cst_82 = arith.constant dense<0.000000e+00> : vector<8x64xf32>
    %157 = tpu.matmul %155, %156, %cst_82 {dimension_numbers = #tpu.dot_dimension_numbers<[1], [0], [0], [1], [0, 0, 1, 1], [], []>} : vector<8x48xf32>, vector<48x64xf32>, vector<8x64xf32> -> vector<8x64xf32>
    %c0_83 = arith.constant 0 : index
    %c0_84 = arith.constant 0 : index
    %158 = vector.load %arg19[%c0_83, %c0_84] : memref<8x64xf32, #tpu.memory_space<vmem>>, vector<8x64xf32>
    tpu.vector_store %arg19[%c0_83, %c0_84], %157 {strides = array<i32>} : memref<8x64xf32, #tpu.memory_space<vmem>>, vector<8x64xf32>,
    return
  }
  func.func @transform_0(%arg0: i32) -> (i32, i32) {
    %c0_i32 = arith.constant 0 : i32
    %c0_i32_0 = arith.constant 0 : i32
    %c0_i32_1 = arith.constant 0 : i32
    return %c0_i32, %c0_i32_0 : i32, i32
  }
  func.func @transform_1(%arg0: i32) -> (i32, i32) {
    %c0_i32 = arith.constant 0 : i32
    %c0_i32_0 = arith.constant 0 : i32
    %c0_i32_1 = arith.constant 0 : i32
    return %c0_i32, %c0_i32_0 : i32, i32
  }
  func.func @transform_2(%arg0: i32) -> (i32, i32) {
    %c0_i32 = arith.constant 0 : i32
    %c0_i32_0 = arith.constant 0 : i32
    %c0_i32_1 = arith.constant 0 : i32
    return %c0_i32, %c0_i32_0 : i32, i32
  }
  func.func @transform_3(%arg0: i32) -> (i32, i32) {
    %c0_i32 = arith.constant 0 : i32
    %c0_i32_0 = arith.constant 0 : i32
    %c0_i32_1 = arith.constant 0 : i32
    return %c0_i32, %c0_i32_0 : i32, i32
  }
  func.func @transform_4(%arg0: i32) -> (i32, i32, i32) {
    %c0_i32 = arith.constant 0 : i32
    %c0_i32_0 = arith.constant 0 : i32
    %c0_i32_1 = arith.constant 0 : i32
    %c0_i32_2 = arith.constant 0 : i32
    return %c0_i32, %c0_i32_0, %c0_i32_1 : i32, i32, i32
  }
  func.func @transform_5(%arg0: i32) -> (i32, i32) {
    %c0_i32 = arith.constant 0 : i32
    %c0_i32_0 = arith.constant 0 : i32
    %c0_i32_1 = arith.constant 0 : i32
    return %c0_i32, %c0_i32_0 : i32, i32
  }
  func.func @transform_6(%arg0: i32) -> (i32, i32) {
    %c0_i32 = arith.constant 0 : i32
    %c0_i32_0 = arith.constant 0 : i32
    %c0_i32_1 = arith.constant 0 : i32
    return %c0_i32, %c0_i32_0 : i32, i32
  }
  func.func @transform_7(%arg0: i32) -> (i32, i32) {
    %c0_i32 = arith.constant 0 : i32
    %c0_i32_0 = arith.constant 0 : i32
    %c0_i32_1 = arith.constant 0 : i32
    return %c0_i32, %c0_i32_0 : i32, i32
  }
  func.func @transform_8(%arg0: i32) -> (i32, i32) {
    %c0_i32 = arith.constant 0 : i32
    %c0_i32_0 = arith.constant 0 : i32
    %c0_i32_1 = arith.constant 0 : i32
    return %c0_i32, %c0_i32_0 : i32, i32
  }
  func.func @transform_9(%arg0: i32) -> (i32, i32) {
    %c0_i32 = arith.constant 0 : i32
    %c0_i32_0 = arith.constant 0 : i32
    %c0_i32_1 = arith.constant 0 : i32
    return %c0_i32, %c0_i32_0 : i32, i32
  }
  func.func @transform_10(%arg0: i32) -> (i32, i32) {
    %c0_i32 = arith.constant 0 : i32
    %c0_i32_0 = arith.constant 0 : i32
    %c0_i32_1 = arith.constant 0 : i32
    return %c0_i32, %c0_i32_0 : i32, i32
  }
  func.func @transform_11(%arg0: i32) -> (i32, i32) {
    %c0_i32 = arith.constant 0 : i32
    %c0_i32_0 = arith.constant 0 : i32
    %c0_i32_1 = arith.constant 0 : i32
    return %c0_i32, %c0_i32_0 : i32, i32
  }
  func.func @transform_12(%arg0: i32) -> (i32, i32) {
    %c0_i32 = arith.constant 0 : i32
    %c0_i32_0 = arith.constant 0 : i32
    %c0_i32_1 = arith.constant 0 : i32
    return %c0_i32, %c0_i32_0 : i32, i32
  }
  func.func @transform_13(%arg0: i32) -> (i32, i32) {
    %c0_i32 = arith.constant 0 : i32
    %c0_i32_0 = arith.constant 0 : i32
    %c0_i32_1 = arith.constant 0 : i32
    return %c0_i32, %c0_i32_0 : i32, i32
  }
  func.func @transform_14(%arg0: i32) -> (i32, i32) {
    %c0_i32 = arith.constant 0 : i32
    %c0_i32_0 = arith.constant 0 : i32
    %c0_i32_1 = arith.constant 0 : i32
    return %c0_i32, %c0_i32_0 : i32, i32
  }
  func.func @transform_15(%arg0: i32) -> (i32, i32, i32) {
    %c0_i32 = arith.constant 0 : i32
    %c0_i32_0 = arith.constant 0 : i32
    %c0_i32_1 = arith.constant 0 : i32
    %c0_i32_2 = arith.constant 0 : i32
    return %c0_i32, %c0_i32_0, %c0_i32_1 : i32, i32, i32
  }
  func.func @transform_16(%arg0: i32) -> (i32, i32) {
    %c0_i32 = arith.constant 0 : i32
    %c0_i32_0 = arith.constant 0 : i32
    %c0_i32_1 = arith.constant 0 : i32
    return %c0_i32, %c0_i32_0 : i32, i32
  }
  func.func @transform_17(%arg0: i32) -> (i32, i32) {
    %c0_i32 = arith.constant 0 : i32
    %c0_i32_0 = arith.constant 0 : i32
    %c0_i32_1 = arith.constant 0 : i32
    return %c0_i32, %c0_i32_0 : i32, i32
  }
  func.func @transform_18(%arg0: i32) -> (i32, i32) {
    %c0_i32 = arith.constant 0 : i32
    %c0_i32_0 = arith.constant 0 : i32
    %c0_i32_1 = arith.constant 0 : i32
    return %c0_i32, %c0_i32_0 : i32, i32
  }
  func.func @transform_19(%arg0: i32) -> (i32, i32) {
    %c0_i32 = arith.constant 0 : i32
    %c0_i32_0 = arith.constant 0 : i32
    %c0_i32_1 = arith.constant 0 : i32
    return %c0_i32, %c0_i32_0 : i32, i32
  }
  func.func @transform_20(%arg0: i32) -> (i32, i32) {
    %c0_i32 = arith.constant 0 : i32
    %c0_i32_0 = arith.constant 0 : i32
    %c0_i32_1 = arith.constant 0 : i32
    return %c0_i32, %c0_i32_0 : i32, i32
  }
  func.func @transform_21(%arg0: i32) -> (i32, i32) {
    %c0_i32 = arith.constant 0 : i32
    %c0_i32_0 = arith.constant 0 : i32
    %c0_i32_1 = arith.constant 0 : i32
    return %c0_i32, %c0_i32_0 : i32, i32
  }
}

</mosaic_0001>

<llo_original>
// kernel: vc_model_forward.1
$region0: #{vc_model_forward.1}
  #allocation0 [shape = 'u32[]', space=smem, size = 0x4, offset = 0x4, fixed_abs, tag = 'smem constant byte address 0x4 - core index']
  #allocation1 [shape = 'u32[144,128]{1,0:T(1,128)}', space=vmem, size = 0x12000, scoped, tag = 'internal scratch']
  %s0 = inlined_call_operand.vmem [shape: bf16[64,20], index: 0, kind: input, shape index: {}]
  %s1 = inlined_call_operand.vmem [shape: bf16[8,64], index: 1, kind: input, shape index: {}]
  %s2 = inlined_call_operand.vmem [shape: f32[8,1], index: 2, kind: input, shape index: {}]
  %s3 = inlined_call_operand.vmem [shape: f32[1,20], index: 3, kind: input, shape index: {}]
  %s4 = inlined_call_operand.vmem [shape: bf16[3,16,8], index: 4, kind: input, shape index: {}]
  %s5 = inlined_call_operand.vmem [shape: f32[16,1], index: 5, kind: input, shape index: {}]
  %s6 = inlined_call_operand.vmem [shape: bf16[16,16], index: 6, kind: input, shape index: {}]
  %s7 = inlined_call_operand.vmem [shape: f32[16,1], index: 7, kind: input, shape index: {}]
  %s8 = inlined_call_operand.vmem [shape: f32[20,2], index: 8, kind: input, shape index: {}]
  %s9 = inlined_call_operand.vmem [shape: f32[2,20], index: 9, kind: input, shape index: {}]
  %s10 = inlined_call_operand.vmem [shape: f32[16,16], index: 10, kind: input, shape index: {}]
  %s11 = inlined_call_operand.vmem [shape: f32[16,16], index: 11, kind: input, shape index: {}]
  %s12 = inlined_call_operand.vmem [shape: f32[20,48], index: 12, kind: input, shape index: {}]
  %s13 = inlined_call_operand.vmem [shape: f32[2,4], index: 13, kind: input, shape index: {}]
  %s14 = inlined_call_operand.vmem [shape: f32[4,48], index: 14, kind: input, shape index: {}]
  %s15 = inlined_call_operand.vmem [shape: bf16[3,8,16], index: 15, kind: input, shape index: {}]
  %s16 = inlined_call_operand.vmem [shape: f32[8,1], index: 16, kind: input, shape index: {}]
  %s17 = inlined_call_operand.vmem [shape: f32[48,64], index: 17, kind: input, shape index: {}]
  %s18 = inlined_call_operand.vmem [shape: f32[8,64], index: 18, kind: output, shape index: {0}]
  %s19 = inlined_call_operand.vmem [shape: f32[16,20], index: 19, kind: output, shape index: {1}]
  %s20 = inlined_call_operand.vmem [shape: f32[16,2], index: 20, kind: output, shape index: {2}]
  %s21 = inlined_call_operand.hbm [shape: f32[1,1], index: 21, kind: output, shape index: {3}]
  %22 = xla_tuple %s18, %s19, %s20, %s21
  %s23 = sld [smem:[#allocation0]]
  $region106: #{vc_model_forward.1} parent=0
    _
  %s25 = ssub.s32 1, %s23
  %s26 = scalar_select 0, %s25, %s23
  $region1: #{vc_model_forward.1} parent=0
    #allocation2 [shape = 'u8[512]{0}', space=vmem, size = 0x400, scoped, tag = 'output window, operand 3, single buffered']
    #allocation3 [shape = 's32[1]{0}', space=sflag, size = 0x4, scoped, tag = 'scoped memory for vc_model_forward.1']
    %27 = vsyncpa [#allocation3], 0
    // Predicated region
    $region2: #{vc_model_forward.1} parent=1 // pred_check
      _
    $region3: #{vc_model_forward.1} parent=1 // pred_check_branch
      %29 = sbr.rel (0) target = $region5
    $region4: #{vc_model_forward.1} parent=1 // pred_region
      _
    $region5: #{vc_model_forward.1} parent=1 // pred_fallthru
      _
    // Predicated region
    $region6: #{vc_model_forward.1} parent=1 // pred_check
      _
    $region7: #{vc_model_forward.1} parent=1 // pred_check_branch
      %31 = sbr.rel (0) target = $region9
    $region8: #{vc_model_forward.1} parent=1 // pred_region
      _
    $region9: #{vc_model_forward.1} parent=1 // pred_fallthru
      _
    // Predicated region
    $region10: #{vc_model_forward.1} parent=1 // pred_check
      _
    $region11: #{vc_model_forward.1} parent=1 // pred_check_branch
      %33 = sbr.rel (0) target = $region13
    $region12: #{vc_model_forward.1} parent=1 // pred_region
      _
    $region13: #{vc_model_forward.1} parent=1 // pred_fallthru
      _
    // Predicated region
    $region14: #{vc_model_forward.1} parent=1 // pred_check
      _
    $region15: #{vc_model_forward.1} parent=1 // pred_check_branch
      %35 = sbr.rel (0) target = $region17
    $region16: #{vc_model_forward.1} parent=1 // pred_region
      _
    $region17: #{vc_model_forward.1} parent=1 // pred_fallthru
      _
    // Predicated region
    $region18: #{vc_model_forward.1} parent=1 // pred_check
      _
    $region19: #{vc_model_forward.1} parent=1 // pred_check_branch
      %37 = sbr.rel (0) target = $region21
    $region20: #{vc_model_forward.1} parent=1 // pred_region
      _
    $region21: #{vc_model_forward.1} parent=1 // pred_fallthru
      _
    // Predicated region
    $region22: #{vc_model_forward.1} parent=1 // pred_check
      _
    $region23: #{vc_model_forward.1} parent=1 // pred_check_branch
      %39 = sbr.rel (0) target = $region25
    $region24: #{vc_model_forward.1} parent=1 // pred_region
      _
    $region25: #{vc_model_forward.1} parent=1 // pred_fallthru
      _
    // Predicated region
    $region26: #{vc_model_forward.1} parent=1 // pred_check
      _
    $region27: #{vc_model_forward.1} parent=1 // pred_check_branch
      %41 = sbr.rel (0) target = $region29
    $region28: #{vc_model_forward.1} parent=1 // pred_region
      _
    $region29: #{vc_model_forward.1} parent=1 // pred_fallthru
      _
    // Predicated region
    $region30: #{vc_model_forward.1} parent=1 // pred_check
      _
    $region31: #{vc_model_forward.1} parent=1 // pred_check_branch
      %43 = sbr.rel (0) target = $region33
    $region32: #{vc_model_forward.1} parent=1 // pred_region
      _
    $region33: #{vc_model_forward.1} parent=1 // pred_fallthru
      _
    // Predicated region
    $region34: #{vc_model_forward.1} parent=1 // pred_check
      _
    $region35: #{vc_model_forward.1} parent=1 // pred_check_branch
      %45 = sbr.rel (0) target = $region37
    $region36: #{vc_model_forward.1} parent=1 // pred_region
      _
    $region37: #{vc_model_forward.1} parent=1 // pred_fallthru
      _
    // Predicated region
    $region38: #{vc_model_forward.1} parent=1 // pred_check
      _
    $region39: #{vc_model_forward.1} parent=1 // pred_check_branch
      %47 = sbr.rel (0) target = $region41
    $region40: #{vc_model_forward.1} parent=1 // pred_region
      _
    $region41: #{vc_model_forward.1} parent=1 // pred_fallthru
      _
    // Predicated region
    $region42: #{vc_model_forward.1} parent=1 // pred_check
      _
    $region43: #{vc_model_forward.1} parent=1 // pred_check_branch
      %49 = sbr.rel (0) target = $region45
    $region44: #{vc_model_forward.1} parent=1 // pred_region
      _
    $region45: #{vc_model_forward.1} parent=1 // pred_fallthru
      _
    // Predicated region
    $region46: #{vc_model_forward.1} parent=1 // pred_check
      _
    $region47: #{vc_model_forward.1} parent=1 // pred_check_branch
      %51 = sbr.rel (0) target = $region49
    $region48: #{vc_model_forward.1} parent=1 // pred_region
      _
    $region49: #{vc_model_forward.1} parent=1 // pred_fallthru
      _
    // Predicated region
    $region50: #{vc_model_forward.1} parent=1 // pred_check
      _
    $region51: #{vc_model_forward.1} parent=1 // pred_check_branch
      %53 = sbr.rel (0) target = $region53
    $region52: #{vc_model_forward.1} parent=1 // pred_region
      _
    $region53: #{vc_model_forward.1} parent=1 // pred_fallthru
      _
    // Predicated region
    $region54: #{vc_model_forward.1} parent=1 // pred_check
      _
    $region55: #{vc_model_forward.1} parent=1 // pred_check_branch
      %55 = sbr.rel (0) target = $region57
    $region56: #{vc_model_forward.1} parent=1 // pred_region
      _
    $region57: #{vc_model_forward.1} parent=1 // pred_fallthru
      _
    // Predicated region
    $region58: #{vc_model_forward.1} parent=1 // pred_check
      _
    $region59: #{vc_model_forward.1} parent=1 // pred_check_branch
      %57 = sbr.rel (0) target = $region61
    $region60: #{vc_model_forward.1} parent=1 // pred_region
      _
    $region61: #{vc_model_forward.1} parent=1 // pred_fallthru
      _
    // Predicated region
    $region62: #{vc_model_forward.1} parent=1 // pred_check
      _
    $region63: #{vc_model_forward.1} parent=1 // pred_check_branch
      %59 = sbr.rel (0) target = $region65
    $region64: #{vc_model_forward.1} parent=1 // pred_region
      _
    $region65: #{vc_model_forward.1} parent=1 // pred_fallthru
      _
    // Predicated region
    $region66: #{vc_model_forward.1} parent=1 // pred_check
      _
    $region67: #{vc_model_forward.1} parent=1 // pred_check_branch
      %61 = sbr.rel (0) target = $region69
    $region68: #{vc_model_forward.1} parent=1 // pred_region
      _
    $region69: #{vc_model_forward.1} parent=1 // pred_fallthru
      _
    // Predicated region
    $region70: #{vc_model_forward.1} parent=1 // pred_check
      _
    $region71: #{vc_model_forward.1} parent=1 // pred_check_branch
      %63 = sbr.rel (0) target = $region73
    $region72: #{vc_model_forward.1} parent=1 // pred_region
      _
    $region73: #{vc_model_forward.1} parent=1 // pred_fallthru
      _
    %v65 = vld [vmem:[%s3] sm:$0x1]
    %v66 = vld [vmem:[%s1] sm:$0xf]
    %v67 = vld [vmem:[%s0] sm:$0xf]
    %v68 = vld [vmem:[%s0 + $0x4] sm:$0xf]
    %v69 = vld [vmem:[%s0 + $0x8] sm:$0xf]
    %v70 = vld [vmem:[%s0 + $0xc] sm:$0xf]
    %v71 = vld [vmem:[%s0 + $0x10] sm:$0xf]
    %v72 = vld [vmem:[%s0 + $0x14] sm:$0xf]
    %v73 = vld [vmem:[%s0 + $0x18] sm:$0xf]
    %v74 = vld [vmem:[%s0 + $0x1c] sm:$0xf]
    %v75 = vld [vmem:[%s2] sm:$0xff]
    %77 = vset.pattern.permute.xlu0 0
    %78 = vperm.xlu0 %77, %v75
    %v79 = vpop.permute.xlu0 %78
    %v89 = vunpack.c.l.b16 %v67
    %v90 = vunpack.c.l.b16 %v68
    %v91 = vunpack.c.l.b16 %v69
    %v92 = vunpack.c.l.b16 %v70
    %v93 = vunpack.c.l.b16 %v71
    %v94 = vunpack.c.l.b16 %v72
    %v95 = vunpack.c.l.b16 %v73
    %v96 = vunpack.c.l.b16 %v74
    %v97 = vpack.c.b16 %v90, %v89
    %v98 = vpack.c.b16 %v92, %v91
    %v99 = vpack.c.b16 %v94, %v93
    %v100 = vpack.c.b16 %v96, %v95
    %vm105 = vcmask 523264
    %v107 = vsel %vm105, %v66, 0
    %109 = vmatprep.subr.bf16.mxu0 0
    %110 = vmatpush1.bf16.msra.mxu0 %v97
    %111 = vmatprep.subr.bf16.mxu0 0
    %112 = vmatpush1.bf16.msra.mxu0 %v98
    %113 = vmatprep.subr.bf16.mxu0 0
    %114 = vmatpush1.bf16.msra.mxu0 %v99
    %115 = vmatprep.subr.bf16.mxu0 0
    %116 = vmatpush1.bf16.msra.mxu0 %v100
    %117 = vmatprep.subr.bf16.mxu0 0
    %118 = vmatpush1.bf16.msra.mxu0 0
    %119 = vmatprep.subr.bf16.mxu0 0
    %120 = vmatpush1.bf16.msra.mxu0 0
    %121 = vmatprep.subr.bf16.mxu0 0
    %122 = vmatpush1.bf16.msra.mxu0 0
    %123 = vmatprep.subr.bf16.mxu0 0
    %124 = vmatpush1.bf16.msra.mxu0 0
    %125 = vmatprep.subr.bf16.mxu0 0
    %126 = vmatpush1.bf16.msra.mxu0 0
    %127 = vmatprep.subr.bf16.mxu0 0
    %128 = vmatpush1.bf16.msra.mxu0 0
    %129 = vmatprep.subr.bf16.mxu0 0
    %130 = vmatpush1.bf16.msra.mxu0 0
    %131 = vmatprep.subr.bf16.mxu0 0
    %132 = vmatpush1.bf16.msra.mxu0 0
    %133 = vmatprep.subr.bf16.mxu0 0
    %134 = vmatpush1.bf16.msra.mxu0 0
    %135 = vmatprep.subr.bf16.mxu0 0
    %136 = vmatpush1.bf16.msra.mxu0 0
    %137 = vmatprep.subr.bf16.mxu0 0
    %138 = vmatpush1.bf16.msra.mxu0 0
    %139 = vmatprep.subr.bf16.mxu0 0
    %140 = vmatpush1.bf16.msra.mxu0 0
    %141 = vmatprep.mubr.bf16.mxu0 0
    %142 = vmatmul.mubr.bf16.gmra.mrb[0].mxu0 %v107
    %v143 = vpop.f32.mrb[0].mxu0
    %v144 = vadd.f32 %v79, %v143
    %v145 = vpop.f32.mrb[0].mxu0
    %v146 = vpop.f32.mrb[0].mxu0
    %v147 = vpop.f32.mrb[0].mxu0
    %148 = vdwg.mxu0
    %v149 = vmax.f32 %v144, 0.0
    %v151 = vlaneseq
    %v152 = vshrl.u32 %v151, 7
    %v153 = vsub.s32 0, %v152
    %v154 = vrot.slane %v65, %v153
    %v156 = vmul.f32 %v149, %v154
    %v157 = vlaneseq
    %v158 = vshrl.u32 %v157, 7
    %v159 = vadd.s32 %v158, 8
    %v160 = vadd.s32 %v158, 16
    %v161 = vlaneseq
    %v162 = vand.u32 %v161, 127
    %v163 = vadd.s32 %v158, 1
    %v164 = vadd.s32 %v159, 1
    %v165 = vadd.s32 %v160, 1
    %vm166 = vcmp.eq.s32.totalorder %v162, %v163
    %vm167 = vcmp.eq.s32.totalorder %v162, %v164
    %vm168 = vcmp.eq.s32.totalorder %v162, %v165
    %v169 = vsel %vm166, 1, 0
    %v170 = vsel %vm167, 1, 0
    %v171 = vsel %vm168, 1, 0
    %v172 = vcvt.s32.f32 %v169
    %v173 = vcvt.s32.f32 %v170
    %v174 = vcvt.s32.f32 %v171
    %v175 = vsub.s32 %v158, 1
    %v176 = vsub.s32 %v159, 1
    %v177 = vsub.s32 %v160, 1
    %vm178 = vcmp.eq.s32.totalorder %v162, %v175
    %vm179 = vcmp.eq.s32.totalorder %v162, %v176
    %vm180 = vcmp.eq.s32.totalorder %v162, %v177
    %v181 = vsel %vm178, 1, 0
    %v182 = vsel %vm179, 1, 0
    %v183 = vsel %vm180, 1, 0
    %v184 = vcvt.s32.f32 %v181
    %v185 = vcvt.s32.f32 %v182
    %v186 = vcvt.s32.f32 %v183
    %vm187 = vcmask 162816
    %v189 = vsel %vm187, %v156, 0
    %vm191 = vcmask 1043456
    %v193 = vsel %vm191, %v174, 0
    %195 = vmatprep.subr.mxu0 0.0
    %196 = vmatpush1.msra.mxu0 %v172
    %197 = vmatprep.subr.mxu0 0.0
    %198 = vmatpush1.msra.mxu0 %v173
    %199 = vmatprep.subr.mxu0 0.0
    %200 = vmatpush1.msra.mxu0 %v193
    %201 = vmatprep.subr.mxu0 0.0
    %202 = vmatpush1.msra.mxu0 0.0
    %203 = vmatprep.subr.mxu0 0.0
    %204 = vmatpush1.msra.mxu0 0.0
    %205 = vmatprep.subr.mxu0 0.0
    %206 = vmatpush1.msra.mxu0 0.0
    %207 = vmatprep.subr.mxu0 0.0
    %208 = vmatpush1.msra.mxu0 0.0
    %209 = vmatprep.subr.mxu0 0.0
    %210 = vmatpush1.msra.mxu0 0.0
    %211 = vmatprep.subr.mxu0 0.0
    %212 = vmatpush1.msra.mxu0 0.0
    %213 = vmatprep.subr.mxu0 0.0
    %214 = vmatpush1.msra.mxu0 0.0
    %215 = vmatprep.subr.mxu0 0.0
    %216 = vmatpush1.msra.mxu0 0.0
    %217 = vmatprep.subr.mxu0 0.0
    %218 = vmatpush1.msra.mxu0 0.0
    %219 = vmatprep.subr.mxu0 0.0
    %220 = vmatpush1.msra.mxu0 0.0
    %221 = vmatprep.subr.mxu0 0.0
    %222 = vmatpush1.msra.mxu0 0.0
    %223 = vmatprep.subr.mxu0 0.0
    %224 = vmatpush1.msra.mxu0 0.0
    %225 = vmatprep.subr.mxu0 0.0
    %226 = vmatpush1.msra.mxu0 0.0
    %227 = vmatprep.subr.mxu0 0.0
    %228 = vmatpush1.msra.mxu0 0.0
    %229 = vmatprep.subr.mxu0 0.0
    %230 = vmatpush1.msra.mxu0 0.0
    %231 = vmatprep.subr.mxu0 0.0
    %232 = vmatpush1.msra.mxu0 0.0
    %233 = vmatprep.subr.mxu0 0.0
    %234 = vmatpush1.msra.mxu0 0.0
    %235 = vmatprep.subr.mxu0 0.0
    %236 = vmatpush1.msra.mxu0 0.0
    %237 = vmatprep.subr.mxu0 0.0
    %238 = vmatpush1.msra.mxu0 0.0
    %239 = vmatprep.subr.mxu0 0.0
    %240 = vmatpush1.msra.mxu0 0.0
    %241 = vmatprep.subr.mxu0 0.0
    %242 = vmatpush1.msra.mxu0 0.0
    %243 = vmatprep.subr.mxu0 0.0
    %244 = vmatpush1.msra.mxu0 0.0
    %245 = vmatprep.subr.mxu0 0.0
    %246 = vmatpush1.msra.mxu0 0.0
    %247 = vmatprep.subr.mxu0 0.0
    %248 = vmatpush1.msra.mxu0 0.0
    %249 = vmatprep.subr.mxu0 0.0
    %250 = vmatpush1.msra.mxu0 0.0
    %251 = vmatprep.subr.mxu0 0.0
    %252 = vmatpush1.msra.mxu0 0.0
    %253 = vmatprep.subr.mxu0 0.0
    %254 = vmatpush1.msra.mxu0 0.0
    %255 = vmatprep.subr.mxu0 0.0
    %256 = vmatpush1.msra.mxu0 0.0
    %257 = vmatprep.subr.mxu0 0.0
    %258 = vmatpush1.msra.mxu0 0.0
    %259 = vmatprep.mubr.f32.mxu0 0.0
    %260 = vmatmul.mubr.f32.gmra.mrb[0].mxu0 %v189
    %v261 = vpop.f32.mrb[0].mxu0
    %v262 = vadd.f32 0.0, %v261
    %v263 = vpop.f32.mrb[0].mxu0
    %264 = vdwg.mxu0
    %v265 = vpack.c.bf16 %v262, %v262
    %v266 = vpack.c.bf16 %v156, %v156
    %v268 = vsel %vm191, %v186, 0
    %270 = vmatprep.subr.mxu0 0.0
    %271 = vmatpush1.msra.mxu0 %v184
    %272 = vmatprep.subr.mxu0 0.0
    %273 = vmatpush1.msra.mxu0 %v185
    %274 = vmatprep.subr.mxu0 0.0
    %275 = vmatpush1.msra.mxu0 %v268
    %276 = vmatprep.subr.mxu0 0.0
    %277 = vmatpush1.msra.mxu0 0.0
    %278 = vmatprep.subr.mxu0 0.0
    %279 = vmatpush1.msra.mxu0 0.0
    %280 = vmatprep.subr.mxu0 0.0
    %281 = vmatpush1.msra.mxu0 0.0
    %282 = vmatprep.subr.mxu0 0.0
    %283 = vmatpush1.msra.mxu0 0.0
    %284 = vmatprep.subr.mxu0 0.0
    %285 = vmatpush1.msra.mxu0 0.0
    %286 = vmatprep.subr.mxu0 0.0
    %287 = vmatpush1.msra.mxu0 0.0
    %288 = vmatprep.subr.mxu0 0.0
    %289 = vmatpush1.msra.mxu0 0.0
    %290 = vmatprep.subr.mxu0 0.0
    %291 = vmatpush1.msra.mxu0 0.0
    %292 = vmatprep.subr.mxu0 0.0
    %293 = vmatpush1.msra.mxu0 0.0
    %294 = vmatprep.subr.mxu0 0.0
    %295 = vmatpush1.msra.mxu0 0.0
    %296 = vmatprep.subr.mxu0 0.0
    %297 = vmatpush1.msra.mxu0 0.0
    %298 = vmatprep.subr.mxu0 0.0
    %299 = vmatpush1.msra.mxu0 0.0
    %300 = vmatprep.subr.mxu0 0.0
    %301 = vmatpush1.msra.mxu0 0.0
    %302 = vmatprep.subr.mxu0 0.0
    %303 = vmatpush1.msra.mxu0 0.0
    %304 = vmatprep.subr.mxu0 0.0
    %305 = vmatpush1.msra.mxu0 0.0
    %306 = vmatprep.subr.mxu0 0.0
    %307 = vmatpush1.msra.mxu0 0.0
    %308 = vmatprep.subr.mxu0 0.0
    %309 = vmatpush1.msra.mxu0 0.0
    %310 = vmatprep.subr.mxu0 0.0
    %311 = vmatpush1.msra.mxu0 0.0
    %312 = vmatprep.subr.mxu0 0.0
    %313 = vmatpush1.msra.mxu0 0.0
    %314 = vmatprep.subr.mxu0 0.0
    %315 = vmatpush1.msra.mxu0 0.0
    %316 = vmatprep.subr.mxu0 0.0
    %317 = vmatpush1.msra.mxu0 0.0
    %318 = vmatprep.subr.mxu0 0.0
    %319 = vmatpush1.msra.mxu0 0.0
    %320 = vmatprep.subr.mxu0 0.0
    %321 = vmatpush1.msra.mxu0 0.0
    %322 = vmatprep.subr.mxu0 0.0
    %323 = vmatpush1.msra.mxu0 0.0
    %324 = vmatprep.subr.mxu0 0.0
    %325 = vmatpush1.msra.mxu0 0.0
    %326 = vmatprep.subr.mxu0 0.0
    %327 = vmatpush1.msra.mxu0 0.0
    %328 = vmatprep.subr.mxu0 0.0
    %329 = vmatpush1.msra.mxu0 0.0
    %330 = vmatprep.subr.mxu0 0.0
    %331 = vmatpush1.msra.mxu0 0.0
    %332 = vmatprep.subr.mxu0 0.0
    %333 = vmatpush1.msra.mxu0 0.0
    %334 = vmatprep.mubr.f32.mxu0 0.0
    %335 = vmatmul.mubr.f32.gmra.mrb[0].mxu0 %v189
    %v336 = vpop.f32.mrb[0].mxu0
    %v337 = vadd.f32 0.0, %v336
    %v338 = vpop.f32.mrb[0].mxu0
    %339 = vdwg.mxu0
    %v340 = vpack.c.bf16 %v337, %v337
    %v341 = vld [vmem:[%s4] sm:$0xf]
    %v342 = vld [vmem:[%s4 + $0x4] sm:$0xf]
    %v343 = vld [vmem:[%s4 + $0x8] sm:$0xf]
    %v344 = vld [vmem:[%s4 + $0xc] sm:$0xf]
    %v345 = vld [vmem:[%s4 + $0x10] sm:$0xf]
    %v346 = vld [vmem:[%s4 + $0x14] sm:$0xf]
    %v349 = vunpack.c.l.b16 %v343
    %v350 = vunpack.c.l.b16 %v344
    %v351 = vpack.c.b16 %v350, %v349
    %vm352 = vcmask 64512
    %v354 = vsel %vm352, %v351, 0
    %v357 = vsel %vm191, %v266, 0
    %359 = vmatprep.subr.bf16.mxu0 0
    %360 = vmatpush1.bf16.msra.mxu0 %v357
    %361 = vmatprep.subr.bf16.mxu0 0
    %362 = vmatpush1.bf16.msra.mxu0 0
    %363 = vmatprep.subr.bf16.mxu0 0
    %364 = vmatpush1.bf16.msra.mxu0 0
    %365 = vmatprep.subr.bf16.mxu0 0
    %366 = vmatpush1.bf16.msra.mxu0 0
    %367 = vmatprep.subr.bf16.mxu0 0
    %368 = vmatpush1.bf16.msra.mxu0 0
    %369 = vmatprep.subr.bf16.mxu0 0
    %370 = vmatpush1.bf16.msra.mxu0 0
    %371 = vmatprep.subr.bf16.mxu0 0
    %372 = vmatpush1.bf16.msra.mxu0 0
    %373 = vmatprep.subr.bf16.mxu0 0
    %374 = vmatpush1.bf16.msra.mxu0 0
    %375 = vmatprep.subr.bf16.mxu0 0
    %376 = vmatpush1.bf16.msra.mxu0 0
    %377 = vmatprep.subr.bf16.mxu0 0
    %378 = vmatpush1.bf16.msra.mxu0 0
    %379 = vmatprep.subr.bf16.mxu0 0
    %380 = vmatpush1.bf16.msra.mxu0 0
    %381 = vmatprep.subr.bf16.mxu0 0
    %382 = vmatpush1.bf16.msra.mxu0 0
    %383 = vmatprep.subr.bf16.mxu0 0
    %384 = vmatpush1.bf16.msra.mxu0 0
    %385 = vmatprep.subr.bf16.mxu0 0
    %386 = vmatpush1.bf16.msra.mxu0 0
    %387 = vmatprep.subr.bf16.mxu0 0
    %388 = vmatpush1.bf16.msra.mxu0 0
    %389 = vmatprep.subr.bf16.mxu0 0
    %390 = vmatpush1.bf16.msra.mxu0 0
    %391 = vmatprep.mubr.bf16.mxu0 0
    %392 = vmatmul.mubr.bf16.gmra.mrb[0].mxu0 %v354
    %v393 = vpop.f32.mrb[0].mxu0
    %v394 = vadd.f32 0.0, %v393
    %v395 = vpop.f32.mrb[0].mxu0
    %v396 = vpop.f32.mrb[0].mxu0
    %v397 = vadd.f32 0.0, %v396
    %v398 = vpop.f32.mrb[0].mxu0
    %399 = vdwg.mxu0
    %v402 = vunpack.c.l.b16 %v341
    %v403 = vunpack.c.l.b16 %v342
    %v404 = vpack.c.b16 %v403, %v402
    %v406 = vsel %vm352, %v404, 0
    %v409 = vsel %vm191, %v265, 0
    %411 = vmatprep.subr.bf16.mxu0 0
    %412 = vmatpush1.bf16.msra.mxu0 %v409
    %413 = vmatprep.subr.bf16.mxu0 0
    %414 = vmatpush1.bf16.msra.mxu0 0
    %415 = vmatprep.subr.bf16.mxu0 0
    %416 = vmatpush1.bf16.msra.mxu0 0
    %417 = vmatprep.subr.bf16.mxu0 0
    %418 = vmatpush1.bf16.msra.mxu0 0
    %419 = vmatprep.subr.bf16.mxu0 0
    %420 = vmatpush1.bf16.msra.mxu0 0
    %421 = vmatprep.subr.bf16.mxu0 0
    %422 = vmatpush1.bf16.msra.mxu0 0
    %423 = vmatprep.subr.bf16.mxu0 0
    %424 = vmatpush1.bf16.msra.mxu0 0
    %425 = vmatprep.subr.bf16.mxu0 0
    %426 = vmatpush1.bf16.msra.mxu0 0
    %427 = vmatprep.subr.bf16.mxu0 0
    %428 = vmatpush1.bf16.msra.mxu0 0
    %429 = vmatprep.subr.bf16.mxu0 0
    %430 = vmatpush1.bf16.msra.mxu0 0
    %431 = vmatprep.subr.bf16.mxu0 0
    %432 = vmatpush1.bf16.msra.mxu0 0
    %433 = vmatprep.subr.bf16.mxu0 0
    %434 = vmatpush1.bf16.msra.mxu0 0
    %435 = vmatprep.subr.bf16.mxu0 0
    %436 = vmatpush1.bf16.msra.mxu0 0
    %437 = vmatprep.subr.bf16.mxu0 0
    %438 = vmatpush1.bf16.msra.mxu0 0
    %439 = vmatprep.subr.bf16.mxu0 0
    %440 = vmatpush1.bf16.msra.mxu0 0
    %441 = vmatprep.subr.bf16.mxu0 0
    %442 = vmatpush1.bf16.msra.mxu0 0
    %443 = vmatprep.mubr.bf16.mxu0 0
    %444 = vmatmul.mubr.bf16.gmra.mrb[0].mxu0 %v406
    %v445 = vpop.f32.mrb[0].mxu0
    %v446 = vadd.f32 %v394, %v445
    %v447 = vpop.f32.mrb[0].mxu0
    %v448 = vpop.f32.mrb[0].mxu0
    %v449 = vadd.f32 %v397, %v448
    %v450 = vpop.f32.mrb[0].mxu0
    %451 = vdwg.mxu0
    %v454 = vunpack.c.l.b16 %v345
    %v455 = vunpack.c.l.b16 %v346
    %v456 = vpack.c.b16 %v455, %v454
    %v458 = vsel %vm352, %v456, 0
    %v461 = vsel %vm191, %v340, 0
    %463 = vmatprep.subr.bf16.mxu0 0
    %464 = vmatpush1.bf16.msra.mxu0 %v461
    %465 = vmatprep.subr.bf16.mxu0 0
    %466 = vmatpush1.bf16.msra.mxu0 0
    %467 = vmatprep.subr.bf16.mxu0 0
    %468 = vmatpush1.bf16.msra.mxu0 0
    %469 = vmatprep.subr.bf16.mxu0 0
    %470 = vmatpush1.bf16.msra.mxu0 0
    %471 = vmatprep.subr.bf16.mxu0 0
    %472 = vmatpush1.bf16.msra.mxu0 0
    %473 = vmatprep.subr.bf16.mxu0 0
    %474 = vmatpush1.bf16.msra.mxu0 0
    %475 = vmatprep.subr.bf16.mxu0 0
    %476 = vmatpush1.bf16.msra.mxu0 0
    %477 = vmatprep.subr.bf16.mxu0 0
    %478 = vmatpush1.bf16.msra.mxu0 0
    %479 = vmatprep.subr.bf16.mxu0 0
    %480 = vmatpush1.bf16.msra.mxu0 0
    %481 = vmatprep.subr.bf16.mxu0 0
    %482 = vmatpush1.bf16.msra.mxu0 0
    %483 = vmatprep.subr.bf16.mxu0 0
    %484 = vmatpush1.bf16.msra.mxu0 0
    %485 = vmatprep.subr.bf16.mxu0 0
    %486 = vmatpush1.bf16.msra.mxu0 0
    %487 = vmatprep.subr.bf16.mxu0 0
    %488 = vmatpush1.bf16.msra.mxu0 0
    %489 = vmatprep.subr.bf16.mxu0 0
    %490 = vmatpush1.bf16.msra.mxu0 0
    %491 = vmatprep.subr.bf16.mxu0 0
    %492 = vmatpush1.bf16.msra.mxu0 0
    %493 = vmatprep.subr.bf16.mxu0 0
    %494 = vmatpush1.bf16.msra.mxu0 0
    %495 = vmatprep.mubr.bf16.mxu0 0
    %496 = vmatmul.mubr.bf16.gmra.mrb[0].mxu0 %v458
    %v497 = vpop.f32.mrb[0].mxu0
    %v498 = vadd.f32 0.0, %v497
    %v499 = vpop.f32.mrb[0].mxu0
    %v500 = vpop.f32.mrb[0].mxu0
    %v501 = vadd.f32 0.0, %v500
    %v502 = vpop.f32.mrb[0].mxu0
    %503 = vdwg.mxu0
    %v504 = vadd.f32 %v446, %v498
    %v505 = vadd.f32 %v449, %v501
    %v506 = vld [vmem:[%s5] sm:$0xff]
    %v507 = vld [vmem:[%s5 + $0x8] sm:$0xff]
    %509 = vset.pattern.permute.xlu0 0
    %510 = vperm.xlu0 %509, %v506
    %v511 = vpop.permute.xlu0 %510
    %514 = vset.pattern.permute.xlu0 0
    %515 = vperm.xlu0 %514, %v507
    %v516 = vpop.permute.xlu0 %515
    %v518 = vadd.f32 %v504, %v511
    %v519 = vadd.f32 %v505, %v516
    %v520 = vmax.f32 %v518, 0.0
    %v521 = vmax.f32 %v519, 0.0
    %v522 = vmul.f32 %v520, %v154
    %v523 = vmul.f32 %v521, %v154
    %v524 = vld [vmem:[%s6] sm:$0xf]
    %v525 = vld [vmem:[%s6 + $0x4] sm:$0xf]
    %v526 = vpack.c.bf16 %v523, %v522
    %v527 = vld [vmem:[%s7] sm:$0xff]
    %v528 = vld [vmem:[%s7 + $0x8] sm:$0xff]
    %530 = vset.pattern.permute.xlu0 0
    %531 = vperm.xlu0 %530, %v527
    %v532 = vpop.permute.xlu0 %531
    %535 = vset.pattern.permute.xlu0 0
    %536 = vperm.xlu0 %535, %v528
    %v537 = vpop.permute.xlu0 %536
    %v541 = vunpack.c.l.b16 %v524
    %v542 = vunpack.c.l.b16 %v525
    %v543 = vpack.c.b16 %v542, %v541
    %vm544 = vcmask 130048
    %v546 = vsel %vm544, %v543, 0
    %548 = vmatprep.subr.bf16.mxu0 0
    %549 = vmatpush1.bf16.msra.mxu0 %v526
    %550 = vmatprep.subr.bf16.mxu0 0
    %551 = vmatpush1.bf16.msra.mxu0 0
    %552 = vmatprep.subr.bf16.mxu0 0
    %553 = vmatpush1.bf16.msra.mxu0 0
    %554 = vmatprep.subr.bf16.mxu0 0
    %555 = vmatpush1.bf16.msra.mxu0 0
    %556 = vmatprep.subr.bf16.mxu0 0
    %557 = vmatpush1.bf16.msra.mxu0 0
    %558 = vmatprep.subr.bf16.mxu0 0
    %559 = vmatpush1.bf16.msra.mxu0 0
    %560 = vmatprep.subr.bf16.mxu0 0
    %561 = vmatpush1.bf16.msra.mxu0 0
    %562 = vmatprep.subr.bf16.mxu0 0
    %563 = vmatpush1.bf16.msra.mxu0 0
    %564 = vmatprep.subr.bf16.mxu0 0
    %565 = vmatpush1.bf16.msra.mxu0 0
    %566 = vmatprep.subr.bf16.mxu0 0
    %567 = vmatpush1.bf16.msra.mxu0 0
    %568 = vmatprep.subr.bf16.mxu0 0
    %569 = vmatpush1.bf16.msra.mxu0 0
    %570 = vmatprep.subr.bf16.mxu0 0
    %571 = vmatpush1.bf16.msra.mxu0 0
    %572 = vmatprep.subr.bf16.mxu0 0
    %573 = vmatpush1.bf16.msra.mxu0 0
    %574 = vmatprep.subr.bf16.mxu0 0
    %575 = vmatpush1.bf16.msra.mxu0 0
    %576 = vmatprep.subr.bf16.mxu0 0
    %577 = vmatpush1.bf16.msra.mxu0 0
    %578 = vmatprep.subr.bf16.mxu0 0
    %579 = vmatpush1.bf16.msra.mxu0 0
    %580 = vmatprep.mubr.bf16.mxu0 0
    %581 = vmatmul.mubr.bf16.gmra.mrb[0].mxu0 %v546
    %v582 = vpop.f32.mrb[0].mxu0
    %v583 = vadd.f32 %v532, %v582
    %v584 = vpop.f32.mrb[0].mxu0
    %v585 = vpop.f32.mrb[0].mxu0
    %v586 = vadd.f32 %v537, %v585
    %v587 = vpop.f32.mrb[0].mxu0
    %588 = vdwg.mxu0
    %v589 = vld [vmem:[%s8] sm:$0xff]
    %v590 = vld [vmem:[%s8 + $0x8] sm:$0xff]
    %v591 = vld [vmem:[%s8 + $0x10] sm:$0xf]
    %v592 = vld [vmem:[%s9] sm:$0x3]
    %v594 = vsel %vm187, %v583, 0
    %v597 = vsel %vm187, %v586, 0
    %v600 = vsel %vm191, %v591, 0
    %602 = vmatprep.subr.mxu0 0.0
    %603 = vmatpush1.msra.mxu0 %v589
    %604 = vmatprep.subr.mxu0 0.0
    %605 = vmatpush1.msra.mxu0 %v590
    %606 = vmatprep.subr.mxu0 0.0
    %607 = vmatpush1.msra.mxu0 %v600
    %608 = vmatprep.subr.mxu0 0.0
    %609 = vmatpush1.msra.mxu0 0.0
    %610 = vmatprep.subr.mxu0 0.0
    %611 = vmatpush1.msra.mxu0 0.0
    %612 = vmatprep.subr.mxu0 0.0
    %613 = vmatpush1.msra.mxu0 0.0
    %614 = vmatprep.subr.mxu0 0.0
    %615 = vmatpush1.msra.mxu0 0.0
    %616 = vmatprep.subr.mxu0 0.0
    %617 = vmatpush1.msra.mxu0 0.0
    %618 = vmatprep.subr.mxu0 0.0
    %619 = vmatpush1.msra.mxu0 0.0
    %620 = vmatprep.subr.mxu0 0.0
    %621 = vmatpush1.msra.mxu0 0.0
    %622 = vmatprep.subr.mxu0 0.0
    %623 = vmatpush1.msra.mxu0 0.0
    %624 = vmatprep.subr.mxu0 0.0
    %625 = vmatpush1.msra.mxu0 0.0
    %626 = vmatprep.subr.mxu0 0.0
    %627 = vmatpush1.msra.mxu0 0.0
    %628 = vmatprep.subr.mxu0 0.0
    %629 = vmatpush1.msra.mxu0 0.0
    %630 = vmatprep.subr.mxu0 0.0
    %631 = vmatpush1.msra.mxu0 0.0
    %632 = vmatprep.subr.mxu0 0.0
    %633 = vmatpush1.msra.mxu0 0.0
    %634 = vmatprep.subr.mxu0 0.0
    %635 = vmatpush1.msra.mxu0 0.0
    %636 = vmatprep.subr.mxu0 0.0
    %637 = vmatpush1.msra.mxu0 0.0
    %638 = vmatprep.subr.mxu0 0.0
    %639 = vmatpush1.msra.mxu0 0.0
    %640 = vmatprep.subr.mxu0 0.0
    %641 = vmatpush1.msra.mxu0 0.0
    %642 = vmatprep.subr.mxu0 0.0
    %643 = vmatpush1.msra.mxu0 0.0
    %644 = vmatprep.subr.mxu0 0.0
    %645 = vmatpush1.msra.mxu0 0.0
    %646 = vmatprep.subr.mxu0 0.0
    %647 = vmatpush1.msra.mxu0 0.0
    %648 = vmatprep.subr.mxu0 0.0
    %649 = vmatpush1.msra.mxu0 0.0
    %650 = vmatprep.subr.mxu0 0.0
    %651 = vmatpush1.msra.mxu0 0.0
    %652 = vmatprep.subr.mxu0 0.0
    %653 = vmatpush1.msra.mxu0 0.0
    %654 = vmatprep.subr.mxu0 0.0
    %655 = vmatpush1.msra.mxu0 0.0
    %656 = vmatprep.subr.mxu0 0.0
    %657 = vmatpush1.msra.mxu0 0.0
    %658 = vmatprep.subr.mxu0 0.0
    %659 = vmatpush1.msra.mxu0 0.0
    %660 = vmatprep.subr.mxu0 0.0
    %661 = vmatpush1.msra.mxu0 0.0
    %662 = vmatprep.subr.mxu0 0.0
    %663 = vmatpush1.msra.mxu0 0.0
    %664 = vmatprep.subr.mxu0 0.0
    %665 = vmatpush1.msra.mxu0 0.0
    %666 = vmatprep.mubr.f32.mxu0 0.0
    %667 = vmatmul.mubr.f32.gmra.mrb[0].mxu0 %v594
    %v668 = vpop.f32.mrb[0].mxu0
    %v669 = vadd.f32 0.0, %v668
    %v670 = vpop.f32.mrb[0].mxu0
    %671 = vmatprep.mubr.f32.mxu0 0.0
    %672 = vmatmul.mubr.f32.gmra.mrb[0].mxu0 %v597
    %v673 = vpop.f32.mrb[0].mxu0
    %v674 = vadd.f32 0.0, %v673
    %v675 = vpop.f32.mrb[0].mxu0
    %676 = vdwg.mxu0
    %v677 = vmul.f32 %v669, 0.1
    %v678 = vmul.f32 %v674, 0.1
    %vm679 = vcmask 15360
    %v681 = vsel %vm679, %v677, 0
    %v684 = vsel %vm679, %v678, 0
    %vm686 = vcmask 1041408
    %v688 = vsel %vm686, %v592, 0
    %690 = vmatprep.subr.mxu0 0.0
    %691 = vmatpush1.msra.mxu0 %v688
    %692 = vmatprep.subr.mxu0 0.0
    %693 = vmatpush1.msra.mxu0 0.0
    %694 = vmatprep.subr.mxu0 0.0
    %695 = vmatpush1.msra.mxu0 0.0
    %696 = vmatprep.subr.mxu0 0.0
    %697 = vmatpush1.msra.mxu0 0.0
    %698 = vmatprep.subr.mxu0 0.0
    %699 = vmatpush1.msra.mxu0 0.0
    %700 = vmatprep.subr.mxu0 0.0
    %701 = vmatpush1.msra.mxu0 0.0
    %702 = vmatprep.subr.mxu0 0.0
    %703 = vmatpush1.msra.mxu0 0.0
    %704 = vmatprep.subr.mxu0 0.0
    %705 = vmatpush1.msra.mxu0 0.0
    %706 = vmatprep.subr.mxu0 0.0
    %707 = vmatpush1.msra.mxu0 0.0
    %708 = vmatprep.subr.mxu0 0.0
    %709 = vmatpush1.msra.mxu0 0.0
    %710 = vmatprep.subr.mxu0 0.0
    %711 = vmatpush1.msra.mxu0 0.0
    %712 = vmatprep.subr.mxu0 0.0
    %713 = vmatpush1.msra.mxu0 0.0
    %714 = vmatprep.subr.mxu0 0.0
    %715 = vmatpush1.msra.mxu0 0.0
    %716 = vmatprep.subr.mxu0 0.0
    %717 = vmatpush1.msra.mxu0 0.0
    %718 = vmatprep.subr.mxu0 0.0
    %719 = vmatpush1.msra.mxu0 0.0
    %720 = vmatprep.subr.mxu0 0.0
    %721 = vmatpush1.msra.mxu0 0.0
    %722 = vmatprep.subr.mxu0 0.0
    %723 = vmatpush1.msra.mxu0 0.0
    %724 = vmatprep.subr.mxu0 0.0
    %725 = vmatpush1.msra.mxu0 0.0
    %726 = vmatprep.subr.mxu0 0.0
    %727 = vmatpush1.msra.mxu0 0.0
    %728 = vmatprep.subr.mxu0 0.0
    %729 = vmatpush1.msra.mxu0 0.0
    %730 = vmatprep.subr.mxu0 0.0
    %731 = vmatpush1.msra.mxu0 0.0
    %732 = vmatprep.subr.mxu0 0.0
    %733 = vmatpush1.msra.mxu0 0.0
    %734 = vmatprep.subr.mxu0 0.0
    %735 = vmatpush1.msra.mxu0 0.0
    %736 = vmatprep.subr.mxu0 0.0
    %737 = vmatpush1.msra.mxu0 0.0
    %738 = vmatprep.subr.mxu0 0.0
    %739 = vmatpush1.msra.mxu0 0.0
    %740 = vmatprep.subr.mxu0 0.0
    %741 = vmatpush1.msra.mxu0 0.0
    %742 = vmatprep.subr.mxu0 0.0
    %743 = vmatpush1.msra.mxu0 0.0
    %744 = vmatprep.subr.mxu0 0.0
    %745 = vmatpush1.msra.mxu0 0.0
    %746 = vmatprep.subr.mxu0 0.0
    %747 = vmatpush1.msra.mxu0 0.0
    %748 = vmatprep.subr.mxu0 0.0
    %749 = vmatpush1.msra.mxu0 0.0
    %750 = vmatprep.subr.mxu0 0.0
    %751 = vmatpush1.msra.mxu0 0.0
    %752 = vmatprep.subr.mxu0 0.0
    %753 = vmatpush1.msra.mxu0 0.0
    %754 = vmatprep.mubr.f32.mxu0 0.0
    %755 = vmatmul.mubr.f32.gmra.mrb[0].mxu0 %v681
    %v756 = vpop.f32.mrb[0].mxu0
    %v757 = vadd.f32 0.0, %v756
    %v758 = vpop.f32.mrb[0].mxu0
    %759 = vmatprep.mubr.f32.mxu0 0.0
    %760 = vmatmul.mubr.f32.gmra.mrb[0].mxu0 %v684
    %v761 = vpop.f32.mrb[0].mxu0
    %v762 = vadd.f32 0.0, %v761
    %v763 = vpop.f32.mrb[0].mxu0
    %764 = vdwg.mxu0
    %v765 = vsub.f32 %v583, %v757
    %v766 = vsub.f32 %v586, %v762
    %v767 = vmul.f32 %v765, %v765
    %v768 = vmul.f32 %v766, %v766
    %v770 = vsel %vm187, %v767, 0
    %v773 = vsel %vm187, %v768, 0
    %775 = vmatprep.subr.mxu0 0.0
    %776 = vmatpush1.msra.mxu0 %v589
    %777 = vmatprep.subr.mxu0 0.0
    %778 = vmatpush1.msra.mxu0 %v590
    %779 = vmatprep.subr.mxu0 0.0
    %780 = vmatpush1.msra.mxu0 %v600
    %781 = vmatprep.subr.mxu0 0.0
    %782 = vmatpush1.msra.mxu0 0.0
    %783 = vmatprep.subr.mxu0 0.0
    %784 = vmatpush1.msra.mxu0 0.0
    %785 = vmatprep.subr.mxu0 0.0
    %786 = vmatpush1.msra.mxu0 0.0
    %787 = vmatprep.subr.mxu0 0.0
    %788 = vmatpush1.msra.mxu0 0.0
    %789 = vmatprep.subr.mxu0 0.0
    %790 = vmatpush1.msra.mxu0 0.0
    %791 = vmatprep.subr.mxu0 0.0
    %792 = vmatpush1.msra.mxu0 0.0
    %793 = vmatprep.subr.mxu0 0.0
    %794 = vmatpush1.msra.mxu0 0.0
    %795 = vmatprep.subr.mxu0 0.0
    %796 = vmatpush1.msra.mxu0 0.0
    %797 = vmatprep.subr.mxu0 0.0
    %798 = vmatpush1.msra.mxu0 0.0
    %799 = vmatprep.subr.mxu0 0.0
    %800 = vmatpush1.msra.mxu0 0.0
    %801 = vmatprep.subr.mxu0 0.0
    %802 = vmatpush1.msra.mxu0 0.0
    %803 = vmatprep.subr.mxu0 0.0
    %804 = vmatpush1.msra.mxu0 0.0
    %805 = vmatprep.subr.mxu0 0.0
    %806 = vmatpush1.msra.mxu0 0.0
    %807 = vmatprep.subr.mxu0 0.0
    %808 = vmatpush1.msra.mxu0 0.0
    %809 = vmatprep.subr.mxu0 0.0
    %810 = vmatpush1.msra.mxu0 0.0
    %811 = vmatprep.subr.mxu0 0.0
    %812 = vmatpush1.msra.mxu0 0.0
    %813 = vmatprep.subr.mxu0 0.0
    %814 = vmatpush1.msra.mxu0 0.0
    %815 = vmatprep.subr.mxu0 0.0
    %816 = vmatpush1.msra.mxu0 0.0
    %817 = vmatprep.subr.mxu0 0.0
    %818 = vmatpush1.msra.mxu0 0.0
    %819 = vmatprep.subr.mxu0 0.0
    %820 = vmatpush1.msra.mxu0 0.0
    %821 = vmatprep.subr.mxu0 0.0
    %822 = vmatpush1.msra.mxu0 0.0
    %823 = vmatprep.subr.mxu0 0.0
    %824 = vmatpush1.msra.mxu0 0.0
    %825 = vmatprep.subr.mxu0 0.0
    %826 = vmatpush1.msra.mxu0 0.0
    %827 = vmatprep.subr.mxu0 0.0
    %828 = vmatpush1.msra.mxu0 0.0
    %829 = vmatprep.subr.mxu0 0.0
    %830 = vmatpush1.msra.mxu0 0.0
    %831 = vmatprep.subr.mxu0 0.0
    %832 = vmatpush1.msra.mxu0 0.0
    %833 = vmatprep.subr.mxu0 0.0
    %834 = vmatpush1.msra.mxu0 0.0
    %835 = vmatprep.subr.mxu0 0.0
    %836 = vmatpush1.msra.mxu0 0.0
    %837 = vmatprep.subr.mxu0 0.0
    %838 = vmatpush1.msra.mxu0 0.0
    %839 = vmatprep.mubr.f32.mxu0 0.0
    %840 = vmatmul.mubr.f32.gmra.mrb[0].mxu0 %v770
    %v841 = vpop.f32.mrb[0].mxu0
    %v842 = vadd.f32 0.0, %v841
    %v843 = vpop.f32.mrb[0].mxu0
    %844 = vmatprep.mubr.f32.mxu0 0.0
    %845 = vmatmul.mubr.f32.gmra.mrb[0].mxu0 %v773
    %v846 = vpop.f32.mrb[0].mxu0
    %v847 = vadd.f32 0.0, %v846
    %v848 = vpop.f32.mrb[0].mxu0
    %849 = vdwg.mxu0
    %v850 = vrsqrt.pop %v842
    %v851 = vmul.f32 %v842, %v850
    %vm852 = vcmp.eq.f32.partialorder %v842, inf
    %v853 = vsel %vm852, %v842, %v851
    %vm854 = vcmp.eq.f32.partialorder %v842, 0.0
    %v855 = vand.u32 %v842, 2147483648
    %v856 = vsel %vm854, %v855, %v853
    %v857 = vrsqrt.pop %v847
    %v858 = vmul.f32 %v847, %v857
    %vm859 = vcmp.eq.f32.partialorder %v847, inf
    %v860 = vsel %vm859, %v847, %v858
    %vm861 = vcmp.eq.f32.partialorder %v847, 0.0
    %v862 = vand.u32 %v847, 2147483648
    %v863 = vsel %vm861, %v862, %v860
    %v864 = vadd.f32 %v856, 0.0001
    %v865 = vadd.f32 %v863, 0.0001
    %v866 = vrcp.pop %v864
    %v867 = vmul.f32 1.0, %v866
    %v868 = vrcp.pop %v865
    %v869 = vmul.f32 1.0, %v868
    %v871 = vsel %vm679, %v867, 0
    %v874 = vsel %vm679, %v869, 0
    %876 = vmatprep.subr.mxu0 0.0
    %877 = vmatpush1.msra.mxu0 %v688
    %878 = vmatprep.subr.mxu0 0.0
    %879 = vmatpush1.msra.mxu0 0.0
    %880 = vmatprep.subr.mxu0 0.0
    %881 = vmatpush1.msra.mxu0 0.0
    %882 = vmatprep.subr.mxu0 0.0
    %883 = vmatpush1.msra.mxu0 0.0
    %884 = vmatprep.subr.mxu0 0.0
    %885 = vmatpush1.msra.mxu0 0.0
    %886 = vmatprep.subr.mxu0 0.0
    %887 = vmatpush1.msra.mxu0 0.0
    %888 = vmatprep.subr.mxu0 0.0
    %889 = vmatpush1.msra.mxu0 0.0
    %890 = vmatprep.subr.mxu0 0.0
    %891 = vmatpush1.msra.mxu0 0.0
    %892 = vmatprep.subr.mxu0 0.0
    %893 = vmatpush1.msra.mxu0 0.0
    %894 = vmatprep.subr.mxu0 0.0
    %895 = vmatpush1.msra.mxu0 0.0
    %896 = vmatprep.subr.mxu0 0.0
    %897 = vmatpush1.msra.mxu0 0.0
    %898 = vmatprep.subr.mxu0 0.0
    %899 = vmatpush1.msra.mxu0 0.0
    %900 = vmatprep.subr.mxu0 0.0
    %901 = vmatpush1.msra.mxu0 0.0
    %902 = vmatprep.subr.mxu0 0.0
    %903 = vmatpush1.msra.mxu0 0.0
    %904 = vmatprep.subr.mxu0 0.0
    %905 = vmatpush1.msra.mxu0 0.0
    %906 = vmatprep.subr.mxu0 0.0
    %907 = vmatpush1.msra.mxu0 0.0
    %908 = vmatprep.subr.mxu0 0.0
    %909 = vmatpush1.msra.mxu0 0.0
    %910 = vmatprep.subr.mxu0 0.0
    %911 = vmatpush1.msra.mxu0 0.0
    %912 = vmatprep.subr.mxu0 0.0
    %913 = vmatpush1.msra.mxu0 0.0
    %914 = vmatprep.subr.mxu0 0.0
    %915 = vmatpush1.msra.mxu0 0.0
    %916 = vmatprep.subr.mxu0 0.0
    %917 = vmatpush1.msra.mxu0 0.0
    %918 = vmatprep.subr.mxu0 0.0
    %919 = vmatpush1.msra.mxu0 0.0
    %920 = vmatprep.subr.mxu0 0.0
    %921 = vmatpush1.msra.mxu0 0.0
    %922 = vmatprep.subr.mxu0 0.0
    %923 = vmatpush1.msra.mxu0 0.0
    %924 = vmatprep.subr.mxu0 0.0
    %925 = vmatpush1.msra.mxu0 0.0
    %926 = vmatprep.subr.mxu0 0.0
    %927 = vmatpush1.msra.mxu0 0.0
    %928 = vmatprep.subr.mxu0 0.0
    %929 = vmatpush1.msra.mxu0 0.0
    %930 = vmatprep.subr.mxu0 0.0
    %931 = vmatpush1.msra.mxu0 0.0
    %932 = vmatprep.subr.mxu0 0.0
    %933 = vmatpush1.msra.mxu0 0.0
    %934 = vmatprep.subr.mxu0 0.0
    %935 = vmatpush1.msra.mxu0 0.0
    %936 = vmatprep.subr.mxu0 0.0
    %937 = vmatpush1.msra.mxu0 0.0
    %938 = vmatprep.subr.mxu0 0.0
    %939 = vmatpush1.msra.mxu0 0.0
    %940 = vmatprep.mubr.f32.mxu0 0.0
    %941 = vmatmul.mubr.f32.gmra.mrb[0].mxu0 %v871
    %v942 = vpop.f32.mrb[0].mxu0
    %v943 = vadd.f32 0.0, %v942
    %v944 = vpop.f32.mrb[0].mxu0
    %945 = vmatprep.mubr.f32.mxu0 0.0
    %946 = vmatmul.mubr.f32.gmra.mrb[0].mxu0 %v874
    %v947 = vpop.f32.mrb[0].mxu0
    %v948 = vadd.f32 0.0, %v947
    %v949 = vpop.f32.mrb[0].mxu0
    %950 = vdwg.mxu0
    %v951 = vmul.f32 %v765, %v943
    %v952 = vmul.f32 %v766, %v948
    %v953 = vmul.f32 %v951, %v951
    %v954 = vmul.f32 %v952, %v952
    %v955 = vsel %vm187, %v953, 0.0
    %v956 = vsel %vm187, %v954, 0.0
    %v957 = vadd.f32 %v955, %v956
    %v958 = vrot.slane %v957, 4
    %v959 = vadd.f32 %v957, %v958
    %v960 = vrot.slane %v959, 2
    %v961 = vadd.f32 %v959, %v960
    %v962 = vrot.slane %v961, 1
    %v963 = vadd.f32 %v961, %v962
    %v964 = vrsqrt.pop %v963
    %v965 = vmul.f32 %v963, %v964
    %vm966 = vcmp.eq.f32.partialorder %v963, inf
    %v967 = vsel %vm966, %v963, %v965
    %vm968 = vcmp.eq.f32.partialorder %v963, 0.0
    %v969 = vand.u32 %v963, 2147483648
    %v970 = vsel %vm968, %v969, %v967
    %v971 = vrcp.pop %v970
    %v972 = vmul.f32 %v951, %v971
    %v973 = vmul.f32 %v952, %v971
    %v974 = vld [vmem:[%s10] sm:$0xff]
    %v975 = vld [vmem:[%s10 + $0x8] sm:$0xff]
    %v977 = vsel %vm544, %v974, 0
    %v980 = vsel %vm544, %v975, 0
    %982 = vmatprep.subr.mxu0 0.0
    %983 = vmatpush1.msra.mxu0 %v972
    %984 = vmatprep.subr.mxu0 0.0
    %985 = vmatpush1.msra.mxu0 %v973
    %986 = vmatprep.subr.mxu0 0.0
    %987 = vmatpush1.msra.mxu0 0.0
    %988 = vmatprep.subr.mxu0 0.0
    %989 = vmatpush1.msra.mxu0 0.0
    %990 = vmatprep.subr.mxu0 0.0
    %991 = vmatpush1.msra.mxu0 0.0
    %992 = vmatprep.subr.mxu0 0.0
    %993 = vmatpush1.msra.mxu0 0.0
    %994 = vmatprep.subr.mxu0 0.0
    %995 = vmatpush1.msra.mxu0 0.0
    %996 = vmatprep.subr.mxu0 0.0
    %997 = vmatpush1.msra.mxu0 0.0
    %998 = vmatprep.subr.mxu0 0.0
    %999 = vmatpush1.msra.mxu0 0.0
    %1000 = vmatprep.subr.mxu0 0.0
    %1001 = vmatpush1.msra.mxu0 0.0
    %1002 = vmatprep.subr.mxu0 0.0
    %1003 = vmatpush1.msra.mxu0 0.0
    %1004 = vmatprep.subr.mxu0 0.0
    %1005 = vmatpush1.msra.mxu0 0.0
    %1006 = vmatprep.subr.mxu0 0.0
    %1007 = vmatpush1.msra.mxu0 0.0
    %1008 = vmatprep.subr.mxu0 0.0
    %1009 = vmatpush1.msra.mxu0 0.0
    %1010 = vmatprep.subr.mxu0 0.0
    %1011 = vmatpush1.msra.mxu0 0.0
    %1012 = vmatprep.subr.mxu0 0.0
    %1013 = vmatpush1.msra.mxu0 0.0
    %1014 = vmatprep.subr.mxu0 0.0
    %1015 = vmatpush1.msra.mxu0 0.0
    %1016 = vmatprep.subr.mxu0 0.0
    %1017 = vmatpush1.msra.mxu0 0.0
    %1018 = vmatprep.subr.mxu0 0.0
    %1019 = vmatpush1.msra.mxu0 0.0
    %1020 = vmatprep.subr.mxu0 0.0
    %1021 = vmatpush1.msra.mxu0 0.0
    %1022 = vmatprep.subr.mxu0 0.0
    %1023 = vmatpush1.msra.mxu0 0.0
    %1024 = vmatprep.subr.mxu0 0.0
    %1025 = vmatpush1.msra.mxu0 0.0
    %1026 = vmatprep.subr.mxu0 0.0
    %1027 = vmatpush1.msra.mxu0 0.0
    %1028 = vmatprep.subr.mxu0 0.0
    %1029 = vmatpush1.msra.mxu0 0.0
    %1030 = vmatprep.subr.mxu0 0.0
    %1031 = vmatpush1.msra.mxu0 0.0
    %1032 = vmatprep.subr.mxu0 0.0
    %1033 = vmatpush1.msra.mxu0 0.0
    %1034 = vmatprep.subr.mxu0 0.0
    %1035 = vmatpush1.msra.mxu0 0.0
    %1036 = vmatprep.subr.mxu0 0.0
    %1037 = vmatpush1.msra.mxu0 0.0
    %1038 = vmatprep.subr.mxu0 0.0
    %1039 = vmatpush1.msra.mxu0 0.0
    %1040 = vmatprep.subr.mxu0 0.0
    %1041 = vmatpush1.msra.mxu0 0.0
    %1042 = vmatprep.subr.mxu0 0.0
    %1043 = vmatpush1.msra.mxu0 0.0
    %1044 = vmatprep.subr.mxu0 0.0
    %1045 = vmatpush1.msra.mxu0 0.0
    %1046 = vmatprep.mubr.f32.mxu0 0.0
    %1047 = vmatmul.mubr.f32.gmra.mrb[0].mxu0 %v977
    %v1048 = vpop.f32.mrb[0].mxu0
    %v1049 = vadd.f32 0.0, %v1048
    %v1050 = vpop.f32.mrb[0].mxu0
    %1051 = vmatprep.mubr.f32.mxu0 0.0
    %1052 = vmatmul.mubr.f32.gmra.mrb[0].mxu0 %v980
    %v1053 = vpop.f32.mrb[0].mxu0
    %v1054 = vadd.f32 0.0, %v1053
    %v1055 = vpop.f32.mrb[0].mxu0
    %1056 = vdwg.mxu0
    %v1057 = vsel %vm187, %v1049, -inf
    %v1058 = vsel %vm187, %v1054, -inf
    %v1059 = vmax.f32 %v1057, %v1058
    %v1060 = vrot.slane %v1059, 4
    %v1061 = vmax.f32 %v1059, %v1060
    %v1062 = vrot.slane %v1061, 2
    %v1063 = vmax.f32 %v1061, %v1062
    %v1064 = vrot.slane %v1063, 1
    %v1065 = vmax.f32 %v1063, %v1064
    %vm1066 = vcmp.eq.f32.partialorder %v1049, %v1065
    %vm1067 = vcmp.eq.f32.partialorder %v1054, %v1065
    %v1068 = vsel %vm1066, %v158, 16
    %v1069 = vsel %vm1067, %v159, 16
    %v1070 = vsel %vm187, %v1068, 2147483647
    %v1071 = vsel %vm187, %v1069, 2147483647
    %vm1072 = vcmp.lt.s32.totalorder %v1070, %v1071
    %v1073 = vsel %vm1072, %v1070, %v1071
    %v1074 = vrot.slane %v1073, 4
    %vm1075 = vcmp.lt.s32.totalorder %v1073, %v1074
    %v1076 = vsel %vm1075, %v1073, %v1074
    %v1077 = vrot.slane %v1076, 2
    %vm1078 = vcmp.lt.s32.totalorder %v1076, %v1077
    %v1079 = vsel %vm1078, %v1076, %v1077
    %v1080 = vrot.slane %v1079, 1
    %vm1081 = vcmp.lt.s32.totalorder %v1079, %v1080
    %v1082 = vsel %vm1081, %v1079, %v1080
    %vm1083 = vcmp.eq.s32.totalorder %v158, %v1082
    %vm1084 = vcmp.eq.s32.totalorder %v159, %v1082
    %v1085 = vsel %vm1083, 1, 0
    %v1086 = vsel %vm1084, 1, 0
    %v1087 = vcvt.s32.f32 %v1085
    %v1088 = vcvt.s32.f32 %v1086
    %v1089 = vld [vmem:[%s11] sm:$0xff]
    %v1090 = vld [vmem:[%s11 + $0x8] sm:$0xff]
    %v1092 = vsel %vm544, %v1089, 0
    %v1095 = vsel %vm544, %v1090, 0
    %1097 = vmatprep.subr.mxu0 0.0
    %1098 = vmatpush1.msra.mxu0 %v1087
    %1099 = vmatprep.subr.mxu0 0.0
    %1100 = vmatpush1.msra.mxu0 %v1088
    %1101 = vmatprep.subr.mxu0 0.0
    %1102 = vmatpush1.msra.mxu0 0.0
    %1103 = vmatprep.subr.mxu0 0.0
    %1104 = vmatpush1.msra.mxu0 0.0
    %1105 = vmatprep.subr.mxu0 0.0
    %1106 = vmatpush1.msra.mxu0 0.0
    %1107 = vmatprep.subr.mxu0 0.0
    %1108 = vmatpush1.msra.mxu0 0.0
    %1109 = vmatprep.subr.mxu0 0.0
    %1110 = vmatpush1.msra.mxu0 0.0
    %1111 = vmatprep.subr.mxu0 0.0
    %1112 = vmatpush1.msra.mxu0 0.0
    %1113 = vmatprep.subr.mxu0 0.0
    %1114 = vmatpush1.msra.mxu0 0.0
    %1115 = vmatprep.subr.mxu0 0.0
    %1116 = vmatpush1.msra.mxu0 0.0
    %1117 = vmatprep.subr.mxu0 0.0
    %1118 = vmatpush1.msra.mxu0 0.0
    %1119 = vmatprep.subr.mxu0 0.0
    %1120 = vmatpush1.msra.mxu0 0.0
    %1121 = vmatprep.subr.mxu0 0.0
    %1122 = vmatpush1.msra.mxu0 0.0
    %1123 = vmatprep.subr.mxu0 0.0
    %1124 = vmatpush1.msra.mxu0 0.0
    %1125 = vmatprep.subr.mxu0 0.0
    %1126 = vmatpush1.msra.mxu0 0.0
    %1127 = vmatprep.subr.mxu0 0.0
    %1128 = vmatpush1.msra.mxu0 0.0
    %1129 = vmatprep.subr.mxu0 0.0
    %1130 = vmatpush1.msra.mxu0 0.0
    %1131 = vmatprep.subr.mxu0 0.0
    %1132 = vmatpush1.msra.mxu0 0.0
    %1133 = vmatprep.subr.mxu0 0.0
    %1134 = vmatpush1.msra.mxu0 0.0
    %1135 = vmatprep.subr.mxu0 0.0
    %1136 = vmatpush1.msra.mxu0 0.0
    %1137 = vmatprep.subr.mxu0 0.0
    %1138 = vmatpush1.msra.mxu0 0.0
    %1139 = vmatprep.subr.mxu0 0.0
    %1140 = vmatpush1.msra.mxu0 0.0
    %1141 = vmatprep.subr.mxu0 0.0
    %1142 = vmatpush1.msra.mxu0 0.0
    %1143 = vmatprep.subr.mxu0 0.0
    %1144 = vmatpush1.msra.mxu0 0.0
    %1145 = vmatprep.subr.mxu0 0.0
    %1146 = vmatpush1.msra.mxu0 0.0
    %1147 = vmatprep.subr.mxu0 0.0
    %1148 = vmatpush1.msra.mxu0 0.0
    %1149 = vmatprep.subr.mxu0 0.0
    %1150 = vmatpush1.msra.mxu0 0.0
    %1151 = vmatprep.subr.mxu0 0.0
    %1152 = vmatpush1.msra.mxu0 0.0
    %1153 = vmatprep.subr.mxu0 0.0
    %1154 = vmatpush1.msra.mxu0 0.0
    %1155 = vmatprep.subr.mxu0 0.0
    %1156 = vmatpush1.msra.mxu0 0.0
    %1157 = vmatprep.subr.mxu0 0.0
    %1158 = vmatpush1.msra.mxu0 0.0
    %1159 = vmatprep.subr.mxu0 0.0
    %1160 = vmatpush1.msra.mxu0 0.0
    %1161 = vmatprep.mubr.f32.mxu0 0.0
    %1162 = vmatmul.mubr.f32.gmra.mrb[0].mxu0 %v1092
    %v1163 = vpop.f32.mrb[0].mxu0
    %v1164 = vadd.f32 0.0, %v1163
    %v1165 = vpop.f32.mrb[0].mxu0
    %1166 = vmatprep.mubr.f32.mxu0 0.0
    %1167 = vmatmul.mubr.f32.gmra.mrb[0].mxu0 %v1095
    %v1168 = vpop.f32.mrb[0].mxu0
    %v1169 = vadd.f32 0.0, %v1168
    %v1170 = vpop.f32.mrb[0].mxu0
    %1171 = vdwg.mxu0
    %1172 = vst.msk [vmem:[%s19] sm:$0xff] %vm187, %v1164
    %1173 = vst.msk [vmem:[%s19 + $0x8] sm:$0xff] %vm187, %v1169
    %v1174 = vsub.f32 %v1164, %v972
    %v1175 = vsub.f32 %v1169, %v973
    %v1176 = vmul.f32 %v1174, %v1174
    %v1177 = vmul.f32 %v1175, %v1175
    %v1178 = vsel %vm187, %v1176, 0.0
    %1179 = vadd.xlane.f32.xlu0 %v1178
    %v1180 = vpop.xlane.xlu0 %1179
    %v1181 = vsel %vm187, %v1177, 0.0
    %1182 = vadd.xlane.f32.xlu0 %v1181
    %v1183 = vpop.xlane.xlu0 %1182
    %v1184 = vadd.f32 %v1180, %v1183
    %v1185 = vrot.slane %v1184, 4
    %v1186 = vadd.f32 %v1184, %v1185
    %v1187 = vrot.slane %v1186, 2
    %v1188 = vadd.f32 %v1186, %v1187
    %v1189 = vrot.slane %v1188, 1
    %v1190 = vadd.f32 %v1188, %v1189
    %v1191 = vmul.f32 %v1190, 0.003125
    %vm1192 = vcmask 0
    %1193 = vst.msk [vmem:[#allocation2] sm:$0x1] %vm1192, %v1191
    %v1194 = vsub.f32 %v583, %v1164
    %v1195 = vsub.f32 %v586, %v1169
    %v1197 = vsel %vm187, %v1194, 0
    %v1200 = vsel %vm187, %v1195, 0
    %1202 = vmatprep.subr.mxu0 0.0
    %1203 = vmatpush1.msra.mxu0 %v589
    %1204 = vmatprep.subr.mxu0 0.0
    %1205 = vmatpush1.msra.mxu0 %v590
    %1206 = vmatprep.subr.mxu0 0.0
    %1207 = vmatpush1.msra.mxu0 %v600
    %1208 = vmatprep.subr.mxu0 0.0
    %1209 = vmatpush1.msra.mxu0 0.0
    %1210 = vmatprep.subr.mxu0 0.0
    %1211 = vmatpush1.msra.mxu0 0.0
    %1212 = vmatprep.subr.mxu0 0.0
    %1213 = vmatpush1.msra.mxu0 0.0
    %1214 = vmatprep.subr.mxu0 0.0
    %1215 = vmatpush1.msra.mxu0 0.0
    %1216 = vmatprep.subr.mxu0 0.0
    %1217 = vmatpush1.msra.mxu0 0.0
    %1218 = vmatprep.subr.mxu0 0.0
    %1219 = vmatpush1.msra.mxu0 0.0
    %1220 = vmatprep.subr.mxu0 0.0
    %1221 = vmatpush1.msra.mxu0 0.0
    %1222 = vmatprep.subr.mxu0 0.0
    %1223 = vmatpush1.msra.mxu0 0.0
    %1224 = vmatprep.subr.mxu0 0.0
    %1225 = vmatpush1.msra.mxu0 0.0
    %1226 = vmatprep.subr.mxu0 0.0
    %1227 = vmatpush1.msra.mxu0 0.0
    %1228 = vmatprep.subr.mxu0 0.0
    %1229 = vmatpush1.msra.mxu0 0.0
    %1230 = vmatprep.subr.mxu0 0.0
    %1231 = vmatpush1.msra.mxu0 0.0
    %1232 = vmatprep.subr.mxu0 0.0
    %1233 = vmatpush1.msra.mxu0 0.0
    %1234 = vmatprep.subr.mxu0 0.0
    %1235 = vmatpush1.msra.mxu0 0.0
    %1236 = vmatprep.subr.mxu0 0.0
    %1237 = vmatpush1.msra.mxu0 0.0
    %1238 = vmatprep.subr.mxu0 0.0
    %1239 = vmatpush1.msra.mxu0 0.0
    %1240 = vmatprep.subr.mxu0 0.0
    %1241 = vmatpush1.msra.mxu0 0.0
    %1242 = vmatprep.subr.mxu0 0.0
    %1243 = vmatpush1.msra.mxu0 0.0
    %1244 = vmatprep.subr.mxu0 0.0
    %1245 = vmatpush1.msra.mxu0 0.0
    %1246 = vmatprep.subr.mxu0 0.0
    %1247 = vmatpush1.msra.mxu0 0.0
    %1248 = vmatprep.subr.mxu0 0.0
    %1249 = vmatpush1.msra.mxu0 0.0
    %1250 = vmatprep.subr.mxu0 0.0
    %1251 = vmatpush1.msra.mxu0 0.0
    %1252 = vmatprep.subr.mxu0 0.0
    %1253 = vmatpush1.msra.mxu0 0.0
    %1254 = vmatprep.subr.mxu0 0.0
    %1255 = vmatpush1.msra.mxu0 0.0
    %1256 = vmatprep.subr.mxu0 0.0
    %1257 = vmatpush1.msra.mxu0 0.0
    %1258 = vmatprep.subr.mxu0 0.0
    %1259 = vmatpush1.msra.mxu0 0.0
    %1260 = vmatprep.subr.mxu0 0.0
    %1261 = vmatpush1.msra.mxu0 0.0
    %1262 = vmatprep.subr.mxu0 0.0
    %1263 = vmatpush1.msra.mxu0 0.0
    %1264 = vmatprep.subr.mxu0 0.0
    %1265 = vmatpush1.msra.mxu0 0.0
    %1266 = vmatprep.mubr.f32.mxu0 0.0
    %1267 = vmatmul.mubr.f32.gmra.mrb[0].mxu0 %v1197
    %v1268 = vpop.f32.mrb[0].mxu0
    %v1269 = vadd.f32 0.0, %v1268
    %v1270 = vpop.f32.mrb[0].mxu0
    %1271 = vmatprep.mubr.f32.mxu0 0.0
    %1272 = vmatmul.mubr.f32.gmra.mrb[0].mxu0 %v1200
    %v1273 = vpop.f32.mrb[0].mxu0
    %v1274 = vadd.f32 0.0, %v1273
    %v1275 = vpop.f32.mrb[0].mxu0
    %1276 = vdwg.mxu0
    %v1277 = vmul.f32 %v1269, 0.1
    %v1278 = vmul.f32 %v1274, 0.1
    %v1279 = vmul.f32 %v1277, %v1277
    %v1280 = vmul.f32 %v1278, %v1278
    %v1281 = vsel %vm679, %v1279, 0.0
    %v1282 = vsel %vm679, %v1280, 0.0
    %v1283 = vadd.f32 %v1281, %v1282
    %v1284 = vrot.slane %v1283, 4
    %v1285 = vadd.f32 %v1283, %v1284
    %v1286 = vrot.slane %v1285, 2
    %v1287 = vadd.f32 %v1285, %v1286
    %v1288 = vrot.slane %v1287, 1
    %v1289 = vadd.f32 %v1287, %v1288
    %v1290 = vrsqrt.pop %v1289
    %v1291 = vmul.f32 %v1289, %v1290
    %vm1292 = vcmp.eq.f32.partialorder %v1289, inf
    %v1293 = vsel %vm1292, %v1289, %v1291
    %vm1294 = vcmp.eq.f32.partialorder %v1289, 0.0
    %v1295 = vand.u32 %v1289, 2147483648
    %v1296 = vsel %vm1294, %v1295, %v1293
    %v1297 = vadd.f32 %v1296, 0.0001
    %v1298 = vrcp.pop %v1297
    %v1299 = vmul.f32 %v1277, %v1298
    %v1300 = vmul.f32 %v1278, %v1298
    %v1301 = vrcp.pop 3.0
    %v1302 = vmul.f32 %v1299, %v1301
    %v1303 = vmul.f32 %v1300, %v1301
    %1304 = vst.msk [vmem:[%s20] sm:$0xff] %vm679, %v1302
    %1305 = vst.msk [vmem:[%s20 + $0x8] sm:$0xff] %vm679, %v1303
    %v1306 = vld [vmem:[%s12] sm:$0xff]
    %v1307 = vld [vmem:[%s12 + $0x8] sm:$0xff]
    %v1308 = vld [vmem:[%s12 + $0x10] sm:$0xf]
    %v1309 = vld [vmem:[%s13] sm:$0x3]
    %v1311 = vsel %vm679, %v1302, 0
    %v1314 = vsel %vm679, %v1303, 0
    %v1317 = vsel %vm686, %v1309, 0
    %1319 = vmatprep.subr.mxu0 0.0
    %1320 = vmatpush1.msra.mxu0 %v1317
    %1321 = vmatprep.subr.mxu0 0.0
    %1322 = vmatpush1.msra.mxu0 0.0
    %1323 = vmatprep.subr.mxu0 0.0
    %1324 = vmatpush1.msra.mxu0 0.0
    %1325 = vmatprep.subr.mxu0 0.0
    %1326 = vmatpush1.msra.mxu0 0.0
    %1327 = vmatprep.subr.mxu0 0.0
    %1328 = vmatpush1.msra.mxu0 0.0
    %1329 = vmatprep.subr.mxu0 0.0
    %1330 = vmatpush1.msra.mxu0 0.0
    %1331 = vmatprep.subr.mxu0 0.0
    %1332 = vmatpush1.msra.mxu0 0.0
    %1333 = vmatprep.subr.mxu0 0.0
    %1334 = vmatpush1.msra.mxu0 0.0
    %1335 = vmatprep.subr.mxu0 0.0
    %1336 = vmatpush1.msra.mxu0 0.0
    %1337 = vmatprep.subr.mxu0 0.0
    %1338 = vmatpush1.msra.mxu0 0.0
    %1339 = vmatprep.subr.mxu0 0.0
    %1340 = vmatpush1.msra.mxu0 0.0
    %1341 = vmatprep.subr.mxu0 0.0
    %1342 = vmatpush1.msra.mxu0 0.0
    %1343 = vmatprep.subr.mxu0 0.0
    %1344 = vmatpush1.msra.mxu0 0.0
    %1345 = vmatprep.subr.mxu0 0.0
    %1346 = vmatpush1.msra.mxu0 0.0
    %1347 = vmatprep.subr.mxu0 0.0
    %1348 = vmatpush1.msra.mxu0 0.0
    %1349 = vmatprep.subr.mxu0 0.0
    %1350 = vmatpush1.msra.mxu0 0.0
    %1351 = vmatprep.subr.mxu0 0.0
    %1352 = vmatpush1.msra.mxu0 0.0
    %1353 = vmatprep.subr.mxu0 0.0
    %1354 = vmatpush1.msra.mxu0 0.0
    %1355 = vmatprep.subr.mxu0 0.0
    %1356 = vmatpush1.msra.mxu0 0.0
    %1357 = vmatprep.subr.mxu0 0.0
    %1358 = vmatpush1.msra.mxu0 0.0
    %1359 = vmatprep.subr.mxu0 0.0
    %1360 = vmatpush1.msra.mxu0 0.0
    %1361 = vmatprep.subr.mxu0 0.0
    %1362 = vmatpush1.msra.mxu0 0.0
    %1363 = vmatprep.subr.mxu0 0.0
    %1364 = vmatpush1.msra.mxu0 0.0
    %1365 = vmatprep.subr.mxu0 0.0
    %1366 = vmatpush1.msra.mxu0 0.0
    %1367 = vmatprep.subr.mxu0 0.0
    %1368 = vmatpush1.msra.mxu0 0.0
    %1369 = vmatprep.subr.mxu0 0.0
    %1370 = vmatpush1.msra.mxu0 0.0
    %1371 = vmatprep.subr.mxu0 0.0
    %1372 = vmatpush1.msra.mxu0 0.0
    %1373 = vmatprep.subr.mxu0 0.0
    %1374 = vmatpush1.msra.mxu0 0.0
    %1375 = vmatprep.subr.mxu0 0.0
    %1376 = vmatpush1.msra.mxu0 0.0
    %1377 = vmatprep.subr.mxu0 0.0
    %1378 = vmatpush1.msra.mxu0 0.0
    %1379 = vmatprep.subr.mxu0 0.0
    %1380 = vmatpush1.msra.mxu0 0.0
    %1381 = vmatprep.subr.mxu0 0.0
    %1382 = vmatpush1.msra.mxu0 0.0
    %1383 = vmatprep.mubr.f32.mxu0 0.0
    %1384 = vmatmul.mubr.f32.gmra.mrb[0].mxu0 %v1311
    %v1385 = vpop.f32.mrb[0].mxu0
    %v1386 = vadd.f32 0.0, %v1385
    %v1387 = vpop.f32.mrb[0].mxu0
    %1388 = vmatprep.mubr.f32.mxu0 0.0
    %1389 = vmatmul.mubr.f32.gmra.mrb[0].mxu0 %v1314
    %v1390 = vpop.f32.mrb[0].mxu0
    %v1391 = vadd.f32 0.0, %v1390
    %v1392 = vpop.f32.mrb[0].mxu0
    %1393 = vdwg.mxu0
    %v1394 = vld [vmem:[%s14] sm:$0xf]
    %vm1395 = vcmask 31744
    %v1397 = vsel %vm1395, %v1386, 0
    %v1400 = vsel %vm1395, %v1391, 0
    %v1403 = vsel %vm191, %v1394, 0
    %1405 = vmatprep.subr.mxu0 0.0
    %1406 = vmatpush1.msra.mxu0 %v1403
    %1407 = vmatprep.subr.mxu0 0.0
    %1408 = vmatpush1.msra.mxu0 0.0
    %1409 = vmatprep.subr.mxu0 0.0
    %1410 = vmatpush1.msra.mxu0 0.0
    %1411 = vmatprep.subr.mxu0 0.0
    %1412 = vmatpush1.msra.mxu0 0.0
    %1413 = vmatprep.subr.mxu0 0.0
    %1414 = vmatpush1.msra.mxu0 0.0
    %1415 = vmatprep.subr.mxu0 0.0
    %1416 = vmatpush1.msra.mxu0 0.0
    %1417 = vmatprep.subr.mxu0 0.0
    %1418 = vmatpush1.msra.mxu0 0.0
    %1419 = vmatprep.subr.mxu0 0.0
    %1420 = vmatpush1.msra.mxu0 0.0
    %1421 = vmatprep.subr.mxu0 0.0
    %1422 = vmatpush1.msra.mxu0 0.0
    %1423 = vmatprep.subr.mxu0 0.0
    %1424 = vmatpush1.msra.mxu0 0.0
    %1425 = vmatprep.subr.mxu0 0.0
    %1426 = vmatpush1.msra.mxu0 0.0
    %1427 = vmatprep.subr.mxu0 0.0
    %1428 = vmatpush1.msra.mxu0 0.0
    %1429 = vmatprep.subr.mxu0 0.0
    %1430 = vmatpush1.msra.mxu0 0.0
    %1431 = vmatprep.subr.mxu0 0.0
    %1432 = vmatpush1.msra.mxu0 0.0
    %1433 = vmatprep.subr.mxu0 0.0
    %1434 = vmatpush1.msra.mxu0 0.0
    %1435 = vmatprep.subr.mxu0 0.0
    %1436 = vmatpush1.msra.mxu0 0.0
    %1437 = vmatprep.subr.mxu0 0.0
    %1438 = vmatpush1.msra.mxu0 0.0
    %1439 = vmatprep.subr.mxu0 0.0
    %1440 = vmatpush1.msra.mxu0 0.0
    %1441 = vmatprep.subr.mxu0 0.0
    %1442 = vmatpush1.msra.mxu0 0.0
    %1443 = vmatprep.subr.mxu0 0.0
    %1444 = vmatpush1.msra.mxu0 0.0
    %1445 = vmatprep.subr.mxu0 0.0
    %1446 = vmatpush1.msra.mxu0 0.0
    %1447 = vmatprep.subr.mxu0 0.0
    %1448 = vmatpush1.msra.mxu0 0.0
    %1449 = vmatprep.subr.mxu0 0.0
    %1450 = vmatpush1.msra.mxu0 0.0
    %1451 = vmatprep.subr.mxu0 0.0
    %1452 = vmatpush1.msra.mxu0 0.0
    %1453 = vmatprep.subr.mxu0 0.0
    %1454 = vmatpush1.msra.mxu0 0.0
    %1455 = vmatprep.subr.mxu0 0.0
    %1456 = vmatpush1.msra.mxu0 0.0
    %1457 = vmatprep.subr.mxu0 0.0
    %1458 = vmatpush1.msra.mxu0 0.0
    %1459 = vmatprep.subr.mxu0 0.0
    %1460 = vmatpush1.msra.mxu0 0.0
    %1461 = vmatprep.subr.mxu0 0.0
    %1462 = vmatpush1.msra.mxu0 0.0
    %1463 = vmatprep.subr.mxu0 0.0
    %1464 = vmatpush1.msra.mxu0 0.0
    %1465 = vmatprep.subr.mxu0 0.0
    %1466 = vmatpush1.msra.mxu0 0.0
    %1467 = vmatprep.subr.mxu0 0.0
    %1468 = vmatpush1.msra.mxu0 0.0
    %1469 = vmatprep.mubr.f32.mxu0 0.0
    %1470 = vmatmul.mubr.f32.gmra.mrb[0].mxu0 %v1397
    %v1471 = vpop.f32.mrb[0].mxu0
    %v1472 = vadd.f32 0.0, %v1471
    %v1473 = vpop.f32.mrb[0].mxu0
    %1474 = vmatprep.mubr.f32.mxu0 0.0
    %1475 = vmatmul.mubr.f32.gmra.mrb[0].mxu0 %v1400
    %v1476 = vpop.f32.mrb[0].mxu0
    %v1477 = vadd.f32 0.0, %v1476
    %v1478 = vpop.f32.mrb[0].mxu0
    %1479 = vdwg.mxu0
    %v1481 = vsel %vm187, %v1164, 0
    %v1484 = vsel %vm187, %v1169, 0
    %v1487 = vsel %vm191, %v1308, 0
    %1489 = vmatprep.subr.mxu0 0.0
    %1490 = vmatpush1.msra.mxu0 %v1306
    %1491 = vmatprep.subr.mxu0 0.0
    %1492 = vmatpush1.msra.mxu0 %v1307
    %1493 = vmatprep.subr.mxu0 0.0
    %1494 = vmatpush1.msra.mxu0 %v1487
    %1495 = vmatprep.subr.mxu0 0.0
    %1496 = vmatpush1.msra.mxu0 0.0
    %1497 = vmatprep.subr.mxu0 0.0
    %1498 = vmatpush1.msra.mxu0 0.0
    %1499 = vmatprep.subr.mxu0 0.0
    %1500 = vmatpush1.msra.mxu0 0.0
    %1501 = vmatprep.subr.mxu0 0.0
    %1502 = vmatpush1.msra.mxu0 0.0
    %1503 = vmatprep.subr.mxu0 0.0
    %1504 = vmatpush1.msra.mxu0 0.0
    %1505 = vmatprep.subr.mxu0 0.0
    %1506 = vmatpush1.msra.mxu0 0.0
    %1507 = vmatprep.subr.mxu0 0.0
    %1508 = vmatpush1.msra.mxu0 0.0
    %1509 = vmatprep.subr.mxu0 0.0
    %1510 = vmatpush1.msra.mxu0 0.0
    %1511 = vmatprep.subr.mxu0 0.0
    %1512 = vmatpush1.msra.mxu0 0.0
    %1513 = vmatprep.subr.mxu0 0.0
    %1514 = vmatpush1.msra.mxu0 0.0
    %1515 = vmatprep.subr.mxu0 0.0
    %1516 = vmatpush1.msra.mxu0 0.0
    %1517 = vmatprep.subr.mxu0 0.0
    %1518 = vmatpush1.msra.mxu0 0.0
    %1519 = vmatprep.subr.mxu0 0.0
    %1520 = vmatpush1.msra.mxu0 0.0
    %1521 = vmatprep.subr.mxu0 0.0
    %1522 = vmatpush1.msra.mxu0 0.0
    %1523 = vmatprep.subr.mxu0 0.0
    %1524 = vmatpush1.msra.mxu0 0.0
    %1525 = vmatprep.subr.mxu0 0.0
    %1526 = vmatpush1.msra.mxu0 0.0
    %1527 = vmatprep.subr.mxu0 0.0
    %1528 = vmatpush1.msra.mxu0 0.0
    %1529 = vmatprep.subr.mxu0 0.0
    %1530 = vmatpush1.msra.mxu0 0.0
    %1531 = vmatprep.subr.mxu0 0.0
    %1532 = vmatpush1.msra.mxu0 0.0
    %1533 = vmatprep.subr.mxu0 0.0
    %1534 = vmatpush1.msra.mxu0 0.0
    %1535 = vmatprep.subr.mxu0 0.0
    %1536 = vmatpush1.msra.mxu0 0.0
    %1537 = vmatprep.subr.mxu0 0.0
    %1538 = vmatpush1.msra.mxu0 0.0
    %1539 = vmatprep.subr.mxu0 0.0
    %1540 = vmatpush1.msra.mxu0 0.0
    %1541 = vmatprep.subr.mxu0 0.0
    %1542 = vmatpush1.msra.mxu0 0.0
    %1543 = vmatprep.subr.mxu0 0.0
    %1544 = vmatpush1.msra.mxu0 0.0
    %1545 = vmatprep.subr.mxu0 0.0
    %1546 = vmatpush1.msra.mxu0 0.0
    %1547 = vmatprep.subr.mxu0 0.0
    %1548 = vmatpush1.msra.mxu0 0.0
    %1549 = vmatprep.subr.mxu0 0.0
    %1550 = vmatpush1.msra.mxu0 0.0
    %1551 = vmatprep.subr.mxu0 0.0
    %1552 = vmatpush1.msra.mxu0 0.0
    %1553 = vmatprep.mubr.f32.mxu0 0.0
    %1554 = vmatmul.mubr.f32.gmra.mrb[0].mxu0 %v1481
    %v1555 = vpop.f32.mrb[0].mxu0
    %v1556 = vadd.f32 %v1472, %v1555
    %v1557 = vpop.f32.mrb[0].mxu0
    %1558 = vmatprep.mubr.f32.mxu0 0.0
    %1559 = vmatmul.mubr.f32.gmra.mrb[0].mxu0 %v1484
    %v1560 = vpop.f32.mrb[0].mxu0
    %v1561 = vadd.f32 %v1477, %v1560
    %v1562 = vpop.f32.mrb[0].mxu0
    %1563 = vdwg.mxu0
    %v1564 = vadd.s32 %v158, 24
    %v1565 = vadd.s32 %v158, 32
    %v1566 = vadd.s32 %v158, 40
    %v1567 = vadd.s32 %v1564, 1
    %v1568 = vadd.s32 %v1565, 1
    %v1569 = vadd.s32 %v1566, 1
    %vm1570 = vcmp.eq.s32.totalorder %v162, %v1567
    %vm1571 = vcmp.eq.s32.totalorder %v162, %v1568
    %vm1572 = vcmp.eq.s32.totalorder %v162, %v1569
    %v1573 = vsel %vm1570, 1, 0
    %v1574 = vsel %vm1571, 1, 0
    %v1575 = vsel %vm1572, 1, 0
    %v1576 = vcvt.s32.f32 %v1573
    %v1577 = vcvt.s32.f32 %v1574
    %v1578 = vcvt.s32.f32 %v1575
    %v1579 = vsub.s32 %v1564, 1
    %v1580 = vsub.s32 %v1565, 1
    %v1581 = vsub.s32 %v1566, 1
    %vm1582 = vcmp.eq.s32.totalorder %v162, %v1579
    %vm1583 = vcmp.eq.s32.totalorder %v162, %v1580
    %vm1584 = vcmp.eq.s32.totalorder %v162, %v1581
    %v1585 = vsel %vm1582, 1, 0
    %v1586 = vsel %vm1583, 1, 0
    %v1587 = vsel %vm1584, 1, 0
    %v1588 = vcvt.s32.f32 %v1585
    %v1589 = vcvt.s32.f32 %v1586
    %v1590 = vcvt.s32.f32 %v1587
    %vm1591 = vcmask 392192
    %v1593 = vsel %vm1591, %v1556, 0
    %v1596 = vsel %vm1591, %v1561, 0
    %1598 = vmatprep.subr.mxu0 0.0
    %1599 = vmatpush1.msra.mxu0 %v172
    %1600 = vmatprep.subr.mxu0 0.0
    %1601 = vmatpush1.msra.mxu0 %v173
    %1602 = vmatprep.subr.mxu0 0.0
    %1603 = vmatpush1.msra.mxu0 %v174
    %1604 = vmatprep.subr.mxu0 0.0
    %1605 = vmatpush1.msra.mxu0 %v1576
    %1606 = vmatprep.subr.mxu0 0.0
    %1607 = vmatpush1.msra.mxu0 %v1577
    %1608 = vmatprep.subr.mxu0 0.0
    %1609 = vmatpush1.msra.mxu0 %v1578
    %1610 = vmatprep.subr.mxu0 0.0
    %1611 = vmatpush1.msra.mxu0 0.0
    %1612 = vmatprep.subr.mxu0 0.0
    %1613 = vmatpush1.msra.mxu0 0.0
    %1614 = vmatprep.subr.mxu0 0.0
    %1615 = vmatpush1.msra.mxu0 0.0
    %1616 = vmatprep.subr.mxu0 0.0
    %1617 = vmatpush1.msra.mxu0 0.0
    %1618 = vmatprep.subr.mxu0 0.0
    %1619 = vmatpush1.msra.mxu0 0.0
    %1620 = vmatprep.subr.mxu0 0.0
    %1621 = vmatpush1.msra.mxu0 0.0
    %1622 = vmatprep.subr.mxu0 0.0
    %1623 = vmatpush1.msra.mxu0 0.0
    %1624 = vmatprep.subr.mxu0 0.0
    %1625 = vmatpush1.msra.mxu0 0.0
    %1626 = vmatprep.subr.mxu0 0.0
    %1627 = vmatpush1.msra.mxu0 0.0
    %1628 = vmatprep.subr.mxu0 0.0
    %1629 = vmatpush1.msra.mxu0 0.0
    %1630 = vmatprep.subr.mxu0 0.0
    %1631 = vmatpush1.msra.mxu0 0.0
    %1632 = vmatprep.subr.mxu0 0.0
    %1633 = vmatpush1.msra.mxu0 0.0
    %1634 = vmatprep.subr.mxu0 0.0
    %1635 = vmatpush1.msra.mxu0 0.0
    %1636 = vmatprep.subr.mxu0 0.0
    %1637 = vmatpush1.msra.mxu0 0.0
    %1638 = vmatprep.subr.mxu0 0.0
    %1639 = vmatpush1.msra.mxu0 0.0
    %1640 = vmatprep.subr.mxu0 0.0
    %1641 = vmatpush1.msra.mxu0 0.0
    %1642 = vmatprep.subr.mxu0 0.0
    %1643 = vmatpush1.msra.mxu0 0.0
    %1644 = vmatprep.subr.mxu0 0.0
    %1645 = vmatpush1.msra.mxu0 0.0
    %1646 = vmatprep.subr.mxu0 0.0
    %1647 = vmatpush1.msra.mxu0 0.0
    %1648 = vmatprep.subr.mxu0 0.0
    %1649 = vmatpush1.msra.mxu0 0.0
    %1650 = vmatprep.subr.mxu0 0.0
    %1651 = vmatpush1.msra.mxu0 0.0
    %1652 = vmatprep.subr.mxu0 0.0
    %1653 = vmatpush1.msra.mxu0 0.0
    %1654 = vmatprep.subr.mxu0 0.0
    %1655 = vmatpush1.msra.mxu0 0.0
    %1656 = vmatprep.subr.mxu0 0.0
    %1657 = vmatpush1.msra.mxu0 0.0
    %1658 = vmatprep.subr.mxu0 0.0
    %1659 = vmatpush1.msra.mxu0 0.0
    %1660 = vmatprep.subr.mxu0 0.0
    %1661 = vmatpush1.msra.mxu0 0.0
    %1662 = vmatprep.mubr.f32.mxu0 0.0
    %1663 = vmatmul.mubr.f32.gmra.mrb[0].mxu0 %v1593
    %v1664 = vpop.f32.mrb[0].mxu0
    %v1665 = vadd.f32 0.0, %v1664
    %v1666 = vpop.f32.mrb[0].mxu0
    %1667 = vmatprep.mubr.f32.mxu0 0.0
    %1668 = vmatmul.mubr.f32.gmra.mrb[0].mxu0 %v1596
    %v1669 = vpop.f32.mrb[0].mxu0
    %v1670 = vadd.f32 0.0, %v1669
    %v1671 = vpop.f32.mrb[0].mxu0
    %1672 = vdwg.mxu0
    %v1673 = vpack.c.bf16 %v1670, %v1665
    %v1674 = vpack.c.bf16 %v1561, %v1556
    %1675 = vmatprep.subr.mxu0 0.0
    %1676 = vmatpush1.msra.mxu0 %v184
    %1677 = vmatprep.subr.mxu0 0.0
    %1678 = vmatpush1.msra.mxu0 %v185
    %1679 = vmatprep.subr.mxu0 0.0
    %1680 = vmatpush1.msra.mxu0 %v186
    %1681 = vmatprep.subr.mxu0 0.0
    %1682 = vmatpush1.msra.mxu0 %v1588
    %1683 = vmatprep.subr.mxu0 0.0
    %1684 = vmatpush1.msra.mxu0 %v1589
    %1685 = vmatprep.subr.mxu0 0.0
    %1686 = vmatpush1.msra.mxu0 %v1590
    %1687 = vmatprep.subr.mxu0 0.0
    %1688 = vmatpush1.msra.mxu0 0.0
    %1689 = vmatprep.subr.mxu0 0.0
    %1690 = vmatpush1.msra.mxu0 0.0
    %1691 = vmatprep.subr.mxu0 0.0
    %1692 = vmatpush1.msra.mxu0 0.0
    %1693 = vmatprep.subr.mxu0 0.0
    %1694 = vmatpush1.msra.mxu0 0.0
    %1695 = vmatprep.subr.mxu0 0.0
    %1696 = vmatpush1.msra.mxu0 0.0
    %1697 = vmatprep.subr.mxu0 0.0
    %1698 = vmatpush1.msra.mxu0 0.0
    %1699 = vmatprep.subr.mxu0 0.0
    %1700 = vmatpush1.msra.mxu0 0.0
    %1701 = vmatprep.subr.mxu0 0.0
    %1702 = vmatpush1.msra.mxu0 0.0
    %1703 = vmatprep.subr.mxu0 0.0
    %1704 = vmatpush1.msra.mxu0 0.0
    %1705 = vmatprep.subr.mxu0 0.0
    %1706 = vmatpush1.msra.mxu0 0.0
    %1707 = vmatprep.subr.mxu0 0.0
    %1708 = vmatpush1.msra.mxu0 0.0
    %1709 = vmatprep.subr.mxu0 0.0
    %1710 = vmatpush1.msra.mxu0 0.0
    %1711 = vmatprep.subr.mxu0 0.0
    %1712 = vmatpush1.msra.mxu0 0.0
    %1713 = vmatprep.subr.mxu0 0.0
    %1714 = vmatpush1.msra.mxu0 0.0
    %1715 = vmatprep.subr.mxu0 0.0
    %1716 = vmatpush1.msra.mxu0 0.0
    %1717 = vmatprep.subr.mxu0 0.0
    %1718 = vmatpush1.msra.mxu0 0.0
    %1719 = vmatprep.subr.mxu0 0.0
    %1720 = vmatpush1.msra.mxu0 0.0
    %1721 = vmatprep.subr.mxu0 0.0
    %1722 = vmatpush1.msra.mxu0 0.0
    %1723 = vmatprep.subr.mxu0 0.0
    %1724 = vmatpush1.msra.mxu0 0.0
    %1725 = vmatprep.subr.mxu0 0.0
    %1726 = vmatpush1.msra.mxu0 0.0
    %1727 = vmatprep.subr.mxu0 0.0
    %1728 = vmatpush1.msra.mxu0 0.0
    %1729 = vmatprep.subr.mxu0 0.0
    %1730 = vmatpush1.msra.mxu0 0.0
    %1731 = vmatprep.subr.mxu0 0.0
    %1732 = vmatpush1.msra.mxu0 0.0
    %1733 = vmatprep.subr.mxu0 0.0
    %1734 = vmatpush1.msra.mxu0 0.0
    %1735 = vmatprep.subr.mxu0 0.0
    %1736 = vmatpush1.msra.mxu0 0.0
    %1737 = vmatprep.subr.mxu0 0.0
    %1738 = vmatpush1.msra.mxu0 0.0
    %1739 = vmatprep.mubr.f32.mxu0 0.0
    %1740 = vmatmul.mubr.f32.gmra.mrb[0].mxu0 %v1593
    %v1741 = vpop.f32.mrb[0].mxu0
    %v1742 = vadd.f32 0.0, %v1741
    %v1743 = vpop.f32.mrb[0].mxu0
    %1744 = vmatprep.mubr.f32.mxu0 0.0
    %1745 = vmatmul.mubr.f32.gmra.mrb[0].mxu0 %v1596
    %v1746 = vpop.f32.mrb[0].mxu0
    %v1747 = vadd.f32 0.0, %v1746
    %v1748 = vpop.f32.mrb[0].mxu0
    %1749 = vdwg.mxu0
    %v1750 = vpack.c.bf16 %v1747, %v1742
    %v1751 = vld [vmem:[%s15] sm:$0xf]
    %v1752 = vld [vmem:[%s15 + $0x4] sm:$0xf]
    %v1753 = vld [vmem:[%s15 + $0x8] sm:$0xf]
    %v1755 = vsel %vm544, %v1752, 0
    %1757 = vmatprep.subr.bf16.mxu0 0
    %1758 = vmatpush1.bf16.msra.mxu0 %v1674
    %1759 = vmatprep.subr.bf16.mxu0 0
    %1760 = vmatpush1.bf16.msra.mxu0 0
    %1761 = vmatprep.subr.bf16.mxu0 0
    %1762 = vmatpush1.bf16.msra.mxu0 0
    %1763 = vmatprep.subr.bf16.mxu0 0
    %1764 = vmatpush1.bf16.msra.mxu0 0
    %1765 = vmatprep.subr.bf16.mxu0 0
    %1766 = vmatpush1.bf16.msra.mxu0 0
    %1767 = vmatprep.subr.bf16.mxu0 0
    %1768 = vmatpush1.bf16.msra.mxu0 0
    %1769 = vmatprep.subr.bf16.mxu0 0
    %1770 = vmatpush1.bf16.msra.mxu0 0
    %1771 = vmatprep.subr.bf16.mxu0 0
    %1772 = vmatpush1.bf16.msra.mxu0 0
    %1773 = vmatprep.subr.bf16.mxu0 0
    %1774 = vmatpush1.bf16.msra.mxu0 0
    %1775 = vmatprep.subr.bf16.mxu0 0
    %1776 = vmatpush1.bf16.msra.mxu0 0
    %1777 = vmatprep.subr.bf16.mxu0 0
    %1778 = vmatpush1.bf16.msra.mxu0 0
    %1779 = vmatprep.subr.bf16.mxu0 0
    %1780 = vmatpush1.bf16.msra.mxu0 0
    %1781 = vmatprep.subr.bf16.mxu0 0
    %1782 = vmatpush1.bf16.msra.mxu0 0
    %1783 = vmatprep.subr.bf16.mxu0 0
    %1784 = vmatpush1.bf16.msra.mxu0 0
    %1785 = vmatprep.subr.bf16.mxu0 0
    %1786 = vmatpush1.bf16.msra.mxu0 0
    %1787 = vmatprep.subr.bf16.mxu0 0
    %1788 = vmatpush1.bf16.msra.mxu0 0
    %1789 = vmatprep.mubr.bf16.mxu0 0
    %1790 = vmatmul.mubr.bf16.gmra.mrb[0].mxu0 %v1755
    %v1791 = vpop.f32.mrb[0].mxu0
    %v1792 = vadd.f32 0.0, %v1791
    %v1793 = vpop.f32.mrb[0].mxu0
    %v1794 = vpop.f32.mrb[0].mxu0
    %v1795 = vpop.f32.mrb[0].mxu0
    %1796 = vdwg.mxu0
    %v1798 = vsel %vm544, %v1751, 0
    %1800 = vmatprep.subr.bf16.mxu0 0
    %1801 = vmatpush1.bf16.msra.mxu0 %v1673
    %1802 = vmatprep.subr.bf16.mxu0 0
    %1803 = vmatpush1.bf16.msra.mxu0 0
    %1804 = vmatprep.subr.bf16.mxu0 0
    %1805 = vmatpush1.bf16.msra.mxu0 0
    %1806 = vmatprep.subr.bf16.mxu0 0
    %1807 = vmatpush1.bf16.msra.mxu0 0
    %1808 = vmatprep.subr.bf16.mxu0 0
    %1809 = vmatpush1.bf16.msra.mxu0 0
    %1810 = vmatprep.subr.bf16.mxu0 0
    %1811 = vmatpush1.bf16.msra.mxu0 0
    %1812 = vmatprep.subr.bf16.mxu0 0
    %1813 = vmatpush1.bf16.msra.mxu0 0
    %1814 = vmatprep.subr.bf16.mxu0 0
    %1815 = vmatpush1.bf16.msra.mxu0 0
    %1816 = vmatprep.subr.bf16.mxu0 0
    %1817 = vmatpush1.bf16.msra.mxu0 0
    %1818 = vmatprep.subr.bf16.mxu0 0
    %1819 = vmatpush1.bf16.msra.mxu0 0
    %1820 = vmatprep.subr.bf16.mxu0 0
    %1821 = vmatpush1.bf16.msra.mxu0 0
    %1822 = vmatprep.subr.bf16.mxu0 0
    %1823 = vmatpush1.bf16.msra.mxu0 0
    %1824 = vmatprep.subr.bf16.mxu0 0
    %1825 = vmatpush1.bf16.msra.mxu0 0
    %1826 = vmatprep.subr.bf16.mxu0 0
    %1827 = vmatpush1.bf16.msra.mxu0 0
    %1828 = vmatprep.subr.bf16.mxu0 0
    %1829 = vmatpush1.bf16.msra.mxu0 0
    %1830 = vmatprep.subr.bf16.mxu0 0
    %1831 = vmatpush1.bf16.msra.mxu0 0
    %1832 = vmatprep.mubr.bf16.mxu0 0
    %1833 = vmatmul.mubr.bf16.gmra.mrb[0].mxu0 %v1798
    %v1834 = vpop.f32.mrb[0].mxu0
    %v1835 = vadd.f32 %v1792, %v1834
    %v1836 = vpop.f32.mrb[0].mxu0
    %v1837 = vpop.f32.mrb[0].mxu0
    %v1838 = vpop.f32.mrb[0].mxu0
    %1839 = vdwg.mxu0
    %v1841 = vsel %vm544, %v1753, 0
    %1843 = vmatprep.subr.bf16.mxu0 0
    %1844 = vmatpush1.bf16.msra.mxu0 %v1750
    %1845 = vmatprep.subr.bf16.mxu0 0
    %1846 = vmatpush1.bf16.msra.mxu0 0
    %1847 = vmatprep.subr.bf16.mxu0 0
    %1848 = vmatpush1.bf16.msra.mxu0 0
    %1849 = vmatprep.subr.bf16.mxu0 0
    %1850 = vmatpush1.bf16.msra.mxu0 0
    %1851 = vmatprep.subr.bf16.mxu0 0
    %1852 = vmatpush1.bf16.msra.mxu0 0
    %1853 = vmatprep.subr.bf16.mxu0 0
    %1854 = vmatpush1.bf16.msra.mxu0 0
    %1855 = vmatprep.subr.bf16.mxu0 0
    %1856 = vmatpush1.bf16.msra.mxu0 0
    %1857 = vmatprep.subr.bf16.mxu0 0
    %1858 = vmatpush1.bf16.msra.mxu0 0
    %1859 = vmatprep.subr.bf16.mxu0 0
    %1860 = vmatpush1.bf16.msra.mxu0 0
    %1861 = vmatprep.subr.bf16.mxu0 0
    %1862 = vmatpush1.bf16.msra.mxu0 0
    %1863 = vmatprep.subr.bf16.mxu0 0
    %1864 = vmatpush1.bf16.msra.mxu0 0
    %1865 = vmatprep.subr.bf16.mxu0 0
    %1866 = vmatpush1.bf16.msra.mxu0 0
    %1867 = vmatprep.subr.bf16.mxu0 0
    %1868 = vmatpush1.bf16.msra.mxu0 0
    %1869 = vmatprep.subr.bf16.mxu0 0
    %1870 = vmatpush1.bf16.msra.mxu0 0
    %1871 = vmatprep.subr.bf16.mxu0 0
    %1872 = vmatpush1.bf16.msra.mxu0 0
    %1873 = vmatprep.subr.bf16.mxu0 0
    %1874 = vmatpush1.bf16.msra.mxu0 0
    %1875 = vmatprep.mubr.bf16.mxu0 0
    %1876 = vmatmul.mubr.bf16.gmra.mrb[0].mxu0 %v1841
    %v1877 = vpop.f32.mrb[0].mxu0
    %v1878 = vadd.f32 0.0, %v1877
    %v1879 = vpop.f32.mrb[0].mxu0
    %v1880 = vpop.f32.mrb[0].mxu0
    %v1881 = vpop.f32.mrb[0].mxu0
    %1882 = vdwg.mxu0
    %v1883 = vadd.f32 %v1835, %v1878
    %v1884 = vld [vmem:[%s16] sm:$0xff]
    %1886 = vset.pattern.permute.xlu0 0
    %1887 = vperm.xlu0 %1886, %v1884
    %v1888 = vpop.permute.xlu0 %1887
    %v1890 = vadd.f32 %v1883, %v1888
    %v1891 = vld [vmem:[%s17] sm:$0xff]
    %v1892 = vld [vmem:[%s17 + $0x8] sm:$0xff]
    %v1893 = vld [vmem:[%s17 + $0x10] sm:$0xff]
    %v1894 = vld [vmem:[%s17 + $0x18] sm:$0xff]
    %v1895 = vld [vmem:[%s17 + $0x20] sm:$0xff]
    %v1896 = vld [vmem:[%s17 + $0x28] sm:$0xff]
    %v1898 = vsel %vm1591, %v1890, 0
    %1900 = vmatprep.subr.mxu0 0.0
    %1901 = vmatpush1.msra.mxu0 %v1891
    %1902 = vmatprep.subr.mxu0 0.0
    %1903 = vmatpush1.msra.mxu0 %v1892
    %1904 = vmatprep.subr.mxu0 0.0
    %1905 = vmatpush1.msra.mxu0 %v1893
    %1906 = vmatprep.subr.mxu0 0.0
    %1907 = vmatpush1.msra.mxu0 %v1894
    %1908 = vmatprep.subr.mxu0 0.0
    %1909 = vmatpush1.msra.mxu0 %v1895
    %1910 = vmatprep.subr.mxu0 0.0
    %1911 = vmatpush1.msra.mxu0 %v1896
    %1912 = vmatprep.subr.mxu0 0.0
    %1913 = vmatpush1.msra.mxu0 0.0
    %1914 = vmatprep.subr.mxu0 0.0
    %1915 = vmatpush1.msra.mxu0 0.0
    %1916 = vmatprep.subr.mxu0 0.0
    %1917 = vmatpush1.msra.mxu0 0.0
    %1918 = vmatprep.subr.mxu0 0.0
    %1919 = vmatpush1.msra.mxu0 0.0
    %1920 = vmatprep.subr.mxu0 0.0
    %1921 = vmatpush1.msra.mxu0 0.0
    %1922 = vmatprep.subr.mxu0 0.0
    %1923 = vmatpush1.msra.mxu0 0.0
    %1924 = vmatprep.subr.mxu0 0.0
    %1925 = vmatpush1.msra.mxu0 0.0
    %1926 = vmatprep.subr.mxu0 0.0
    %1927 = vmatpush1.msra.mxu0 0.0
    %1928 = vmatprep.subr.mxu0 0.0
    %1929 = vmatpush1.msra.mxu0 0.0
    %1930 = vmatprep.subr.mxu0 0.0
    %1931 = vmatpush1.msra.mxu0 0.0
    %1932 = vmatprep.subr.mxu0 0.0
    %1933 = vmatpush1.msra.mxu0 0.0
    %1934 = vmatprep.subr.mxu0 0.0
    %1935 = vmatpush1.msra.mxu0 0.0
    %1936 = vmatprep.subr.mxu0 0.0
    %1937 = vmatpush1.msra.mxu0 0.0
    %1938 = vmatprep.subr.mxu0 0.0
    %1939 = vmatpush1.msra.mxu0 0.0
    %1940 = vmatprep.subr.mxu0 0.0
    %1941 = vmatpush1.msra.mxu0 0.0
    %1942 = vmatprep.subr.mxu0 0.0
    %1943 = vmatpush1.msra.mxu0 0.0
    %1944 = vmatprep.subr.mxu0 0.0
    %1945 = vmatpush1.msra.mxu0 0.0
    %1946 = vmatprep.subr.mxu0 0.0
    %1947 = vmatpush1.msra.mxu0 0.0
    %1948 = vmatprep.subr.mxu0 0.0
    %1949 = vmatpush1.msra.mxu0 0.0
    %1950 = vmatprep.subr.mxu0 0.0
    %1951 = vmatpush1.msra.mxu0 0.0
    %1952 = vmatprep.subr.mxu0 0.0
    %1953 = vmatpush1.msra.mxu0 0.0
    %1954 = vmatprep.subr.mxu0 0.0
    %1955 = vmatpush1.msra.mxu0 0.0
    %1956 = vmatprep.subr.mxu0 0.0
    %1957 = vmatpush1.msra.mxu0 0.0
    %1958 = vmatprep.subr.mxu0 0.0
    %1959 = vmatpush1.msra.mxu0 0.0
    %1960 = vmatprep.subr.mxu0 0.0
    %1961 = vmatpush1.msra.mxu0 0.0
    %1962 = vmatprep.subr.mxu0 0.0
    %1963 = vmatpush1.msra.mxu0 0.0
    %1964 = vmatprep.mubr.f32.mxu0 0.0
    %1965 = vmatmul.mubr.f32.gmra.mrb[0].mxu0 %v1898
    %v1966 = vpop.f32.mrb[0].mxu0
    %v1967 = vadd.f32 0.0, %v1966
    %v1968 = vpop.f32.mrb[0].mxu0
    %1969 = vdwg.mxu0
    %1970 = vst.msk [vmem:[%s18] sm:$0xff] %vm105, %v1967
    // Predicated region
    $region74: #{vc_model_forward.1} parent=1 // pred_check
      _
    $region75: #{vc_model_forward.1} parent=1 // pred_check_branch
      %1972 = sbr.rel (0) target = $region77
    $region76: #{vc_model_forward.1} parent=1 // pred_region
      _
    $region77: #{vc_model_forward.1} parent=1 // pred_fallthru
      _
    // Predicated region
    $region78: #{vc_model_forward.1} parent=1 // pred_check
      _
    $region79: #{vc_model_forward.1} parent=1 // pred_check_branch
      %1974 = sbr.rel (0) target = $region81
    $region80: #{vc_model_forward.1} parent=1 // pred_region
      _
    $region81: #{vc_model_forward.1} parent=1 // pred_fallthru
      _
    // Predicated region
    $region82: #{vc_model_forward.1} parent=1 // pred_check
      _
    $region83: #{vc_model_forward.1} parent=1 // pred_check_branch
      %1976 = sbr.rel (0) target = $region85
    $region84: #{vc_model_forward.1} parent=1 // pred_region
      _
    $region85: #{vc_model_forward.1} parent=1 // pred_fallthru
      _
    // Predicated region
    $region86: #{vc_model_forward.1} parent=1 // pred_check
      _
    $region87: #{vc_model_forward.1} parent=1 // pred_check_branch
      %1978 = sbr.rel (0) target = $region89
    $region88: #{vc_model_forward.1} parent=1 // pred_region
      %s1980 = ssub.s32 16, 16
      %1981 = vsyncadd [#allocation3], %s1980
      %s1983 = sshll.u32 [#allocation2], 4
      %s1984 = int_to_ptr.vmem [resolvable:$true] %s1983
      %1986 = dma.vmem_to_hbm [thread:$0]  %s1984, 16, %s21, [#allocation3]
    $region89: #{vc_model_forward.1} parent=1 // pred_fallthru
      _
    // Predicated region
    $region90: #{vc_model_forward.1} parent=1 // pred_check
      _
    $region91: #{vc_model_forward.1} parent=1 // pred_check_branch
      %1988 = sbr.rel (0) target = $region93
    $region92: #{vc_model_forward.1} parent=1 // pred_region
      _
    $region93: #{vc_model_forward.1} parent=1 // pred_fallthru
      _
    // Predicated region
    $region94: #{vc_model_forward.1} parent=1 // pred_check
      _
    $region95: #{vc_model_forward.1} parent=1 // pred_check_branch
      %1990 = sbr.rel (0) target = $region97
    $region96: #{vc_model_forward.1} parent=1 // pred_region
      _
    $region97: #{vc_model_forward.1} parent=1 // pred_fallthru
      _
    // Predicated region
    $region98: #{vc_model_forward.1} parent=1 // pred_check
      _
    $region99: #{vc_model_forward.1} parent=1 // pred_check_branch
      %1992 = sbr.rel (0) target = $region101
    $region100: #{vc_model_forward.1} parent=1 // pred_region
      _
    $region101: #{vc_model_forward.1} parent=1 // pred_fallthru
      _
    // Predicated region
    $region102: #{vc_model_forward.1} parent=1 // pred_check
      _
    $region103: #{vc_model_forward.1} parent=1 // pred_check_branch
      %1994 = sbr.rel (0) target = $region105
    $region104: #{vc_model_forward.1} parent=1 // pred_region
      %1995 = dma.done [#allocation3], 16
    $region105: #{vc_model_forward.1} parent=1 // pred_fallthru
      _
    %1996 = vsyncpa [#allocation3], 1

</llo_original>
